<compile_context>
chip_gen: v7x
topology: tpu7x:2x2x1
jax: 0.10.0
libtpu: 0.0.40
codegen_flags: <defaults>
</compile_context>

<pallas_src>
import math
import functools

import jax
import jax.numpy as jnp
from jax.experimental import pallas as pl
from jax.experimental.pallas import tpu as pltpu


def _layer_norm(x, gamma, beta, eps=1e-5):
    # torch.nn.LayerNorm semantics: biased variance, eps inside rsqrt
    mu = jnp.mean(x, axis=-1, keepdims=True)
    var = jnp.mean((x - mu) ** 2, axis=-1, keepdims=True)
    return (x - mu) * jax.lax.rsqrt(var + eps) * gamma + beta


def encoder_layer_kernel(
    xq_ref, xf_ref, bias_ref,
    wq_ref, bq_ref, wkv_ref, bkv_ref, wo_ref, bo_ref,
    ln1g_ref, ln1b_ref,
    w1_ref, b1_ref, w2_ref, b2_ref,
    ln2g_ref, ln2b_ref,
    out_ref,
    k_scr, v_scr, ctx_scr,
    *, n_heads,
):
    bf = jnp.bfloat16
    xq = xq_ref[...]                       # (TQ, H) f32 query tile (residual path)
    TQ, H = xq.shape
    S = xf_ref.shape[0]
    hd = H // n_heads
    t = pl.program_id(1)

    # ---- K/V projection: once per batch element, result kept in bf16 VMEM scratch
    @pl.when(t == 0)
    def _():
        kv = jnp.dot(xf_ref[...], wkv_ref[...],
                     preferred_element_type=jnp.float32) + bkv_ref[...]
        k_scr[...] = kv[:, :H].astype(bf)
        v_scr[...] = kv[:, H:].astype(bf)

    # ---- Q projection (1/sqrt(head_dim) folded into wq/bq on the host) ----
    q = jnp.dot(xq.astype(bf), wq_ref[...],
                preferred_element_type=jnp.float32) + bq_ref[...]
    q_b = q.astype(bf)                     # single full-width cast
    k_b = k_scr[...]                       # (S, H) bf16
    v_b = v_scr[...]                       # (S, H) bf16

    # additive mask bias, broadcast hoisted out of the head loop
    bias_full = jnp.broadcast_to(bias_ref[...], (TQ, S))

    # ---- per-head attention, lane-contiguous H slices (no transposes) ----
    for h in range(n_heads):               # static unroll, n_heads is small
        sl = slice(h * hd, (h + 1) * hd)
        # energy (TQ, S): contract over head_dim without materializing K^T
        e = jax.lax.dot_general(
            q_b[:, sl], k_b[:, sl], (((1,), (1,)), ((), ())),
            preferred_element_type=jnp.float32)
        e = e + bias_full
        m = jnp.max(e, axis=-1, keepdims=True)
        p = jnp.exp(e - m)                              # f32 EUP exp
        denom = jnp.sum(p, axis=-1, keepdims=True)
        ctx_h = jnp.dot(p.astype(bf), v_b[:, sl],
                        preferred_element_type=jnp.float32)
        # normalize AFTER the PV matmul: (TQ, hd) multiply instead of (TQ, S)
        ctx_scr[:, sl] = ctx_h * pl.reciprocal(denom, approx=True)

    attn_out = jnp.dot(ctx_scr[...].astype(bf), wo_ref[...],
                       preferred_element_type=jnp.float32) + bo_ref[...]

    # ---- residual + LayerNorm 1 (f32) ------------------------------------
    y = _layer_norm(xq + attn_out, ln1g_ref[...], ln1b_ref[...])

    # ---- position-wise feed-forward ---------------------------------------
    h1 = jnp.maximum(
        jnp.dot(y.astype(bf), w1_ref[...],
                preferred_element_type=jnp.float32) + b1_ref[...], 0.0)
    ff = jnp.dot(h1.astype(bf), w2_ref[...],
                 preferred_element_type=jnp.float32) + b2_ref[...]

    # ---- residual + LayerNorm 2 -------------------------------------------
    out_ref[...] = _layer_norm(y + ff, ln2g_ref[...], ln2b_ref[...]).astype(out_ref.dtype)


def _vmem_limit_bytes(S, tq, H, PF, n_heads):
    f4, b2 = 4, 2
    # bf16 weights (counted twice for default double buffering) + f32 bias rows
    weights = 2 * (H * H + H * 2 * H + H * H + H * PF + PF * H) * b2
    biases = (H + 2 * H + H + PF + 5 * H) * f4
    # streamed inputs (double buffered): f32 query tile, bf16 full-seq, mask row
    stream = 2 * (tq * H * f4 + S * H * b2 + S * f4)
    # persistent scratch: bf16 K/V + f32 ctx
    scratch = 2 * S * H * b2 + tq * H * f4
    # f32 (S,2H) intermediate live only during the t==0 K/V fill
    kv_fill = S * 2 * H * f4
    # live attention temporaries (e, p, slack) + q copies
    attn = 4 * tq * S * f4 + 3 * tq * H * f4
    # FFN intermediate + double-buffered output tile
    ffn = tq * PF * f4 + 2 * tq * H * f4
    total = weights + biases + stream + scratch + kv_fill + attn + ffn
    total = int(total * 1.5) + (4 << 20)          # spill headroom + compiler scratch
    try:
        cap = int(pltpu.get_tpu_info().vmem_capacity_bytes) - (8 << 20)
    except Exception:
        cap = 56 << 20                            # safe ceiling for v7x's 64 MiB/TC
    return max(min(total, cap), 16 << 20)


def encoder_layer(src, src_mask, params, *, n_heads, tq=None):
    """src: [B, S, H] f32, src_mask: [B, 1, S] (1 keep / 0 mask)."""
    B, S, H = src.shape
    PF = params['w1'].shape[1]
    assert H % n_heads == 0
    hd = H // n_heads

    if tq is None:
        if S <= 256:
            tq = S
        elif S % 256 == 0:
            tq = 256                      # feed the 256-wide MXU on v6e/v7x
        else:
            tq = 128
    assert S % tq == 0
    n_qt = S // tq

    bf = jnp.bfloat16
    inv_scale = 1.0 / math.sqrt(float(hd))
    row = lambda v: v.reshape(1, -1).astype(jnp.float32)

    # Host-side prep: fold scale into Q weights, fuse K|V, cast weights to bf16,
    # pre-cast the K/V-path activation to bf16, pre-expand the mask to an additive bias.
    wq = (params['wq'] * inv_scale).astype(bf)
    bq = row(params['bq'] * inv_scale)
    wkv = jnp.concatenate([params['wk'], params['wv']], axis=1).astype(bf)
    bkv = row(jnp.concatenate([params['bk'], params['bv']]))
    wo = params['wo'].astype(bf)
    bo = row(params['bo'])
    w1 = params['w1'].astype(bf)
    b1 = row(params['b1'])
    w2 = params['w2'].astype(bf)
    b2 = row(params['b2'])
    ln1g, ln1b = row(params['ln1_g']), row(params['ln1_b'])
    ln2g, ln2b = row(params['ln2_g']), row(params['ln2_b'])

    src_bf = src.astype(bf)                                     # K/V-path input, bf16
    mask_bias = (src_mask.astype(jnp.float32) - 1.0) * 1e10     # 0 keep / -1e10 mask

    def rep(shape):
        return pl.BlockSpec(shape, lambda b, t: (0,) * len(shape))

    in_specs = [
        pl.BlockSpec((None, tq, H), lambda b, t: (b, t, 0)),    # query tile  (TQ, H) f32
        pl.BlockSpec((None, S, H), lambda b, t: (b, 0, 0)),     # full seq    (S, H) bf16
        pl.BlockSpec((None, 1, S), lambda b, t: (b, 0, 0)),     # mask bias   (1, S)
        rep((H, H)), rep((1, H)),          # wq (scaled), bq (scaled)
        rep((H, 2 * H)), rep((1, 2 * H)),  # wkv, bkv
        rep((H, H)), rep((1, H)),          # wo, bo
        rep((1, H)), rep((1, H)),          # ln1 gamma, beta
        rep((H, PF)), rep((1, PF)),        # w1, b1
        rep((PF, H)), rep((1, H)),         # w2, b2
        rep((1, H)), rep((1, H)),          # ln2 gamma, beta
    ]
    out_spec = pl.BlockSpec((None, tq, H), lambda b, t: (b, t, 0))

    kernel = functools.partial(encoder_layer_kernel, n_heads=n_heads)

    return pl.pallas_call(
        kernel,
        out_shape=jax.ShapeDtypeStruct((B, S, H), src.dtype),
        grid_spec=pltpu.PrefetchScalarGridSpec(
            num_scalar_prefetch=0,
            grid=(B, n_qt),
            in_specs=in_specs,
            out_specs=out_spec,
            scratch_shapes=[
                pltpu.VMEM((S, H), bf),             # K scratch (persists across t)
                pltpu.VMEM((S, H), bf),             # V scratch (persists across t)
                pltpu.VMEM((tq, H), jnp.float32),   # per-tile attention context
            ],
        ),
        compiler_params=pltpu.CompilerParams(
            # t axis carries the K/V scratch -> must be 'arbitrary'; batch stays parallel
            dimension_semantics=("parallel", "arbitrary"),
            vmem_limit_bytes=_vmem_limit_bytes(S, tq, H, PF, n_heads)),
    )(
        src, src_bf, mask_bias,
        wq, bq, wkv, bkv, wo, bo,
        ln1g, ln1b,
        w1, b1, w2, b2,
        ln2g, ln2b,
    )


def encoder_layer_ref(src, src_mask, params, *, n_heads):
    """Pure-JAX f32 reference (same math as the PyTorch module, eval mode)."""
    B, S, H = src.shape
    hd = H // n_heads
    scale = math.sqrt(float(hd))

    q = src @ params['wq'] + params['bq']
    k = src @ params['wk'] + params['bk']
    v = src @ params['wv'] + params['bv']
    rh = lambda t: jnp.transpose(t.reshape(B, S, n_heads, hd), (0, 2, 1, 3))
    q, k, v = rh(q), rh(k), rh(v)

    energy = jnp.einsum('bhqd,bhkd->bhqk', q, k) / scale
    energy = jnp.where(src_mask[:, None, :, :] == 0.0, -1e10, energy)
    attn = jax.nn.softmax(energy, axis=-1)
    ctx = jnp.einsum('bhqk,bhkd->bhqd', attn, v)
    ctx = jnp.transpose(ctx, (0, 2, 1, 3)).reshape(B, S, H)
    attn_out = ctx @ params['wo'] + params['bo']

    y = _layer_norm(src + attn_out, params['ln1_g'], params['ln1_b'])
    ff = jnp.maximum(y @ params['w1'] + params['b1'], 0.0) @ params['w2'] + params['b2']
    return _layer_norm(y + ff, params['ln2_g'], params['ln2_b'])


def init_params(key, hid_dim, pf_dim):
    ks = jax.random.split(key, 6)
    s = 0.05
    return {
        'wq': s * jax.random.normal(ks[0], (hid_dim, hid_dim), jnp.float32),
        'bq': jnp.zeros((hid_dim,), jnp.float32),
        'wk': s * jax.random.normal(ks[1], (hid_dim, hid_dim), jnp.float32),
        'bk': jnp.zeros((hid_dim,), jnp.float32),
        'wv': s * jax.random.normal(ks[2], (hid_dim, hid_dim), jnp.float32),
        'bv': jnp.zeros((hid_dim,), jnp.float32),
        'wo': s * jax.random.normal(ks[3], (hid_dim, hid_dim), jnp.float32),
        'bo': jnp.zeros((hid_dim,), jnp.float32),
        'ln1_g': jnp.ones((hid_dim,), jnp.float32),
        'ln1_b': jnp.zeros((hid_dim,), jnp.float32),
        'w1': s * jax.random.normal(ks[4], (hid_dim, pf_dim), jnp.float32),
        'b1': jnp.zeros((pf_dim,), jnp.float32),
        'w2': s * jax.random.normal(ks[5], (pf_dim, hid_dim), jnp.float32),
        'b2': jnp.zeros((hid_dim,), jnp.float32),
        'ln2_g': jnp.ones((hid_dim,), jnp.float32),
        'ln2_b': jnp.zeros((hid_dim,), jnp.float32),
    }


if __name__ == "__main__":
    B, S, H, NH, PF = 2, 8, 32, 4, 64   # batch, seq, hid_dim, n_heads, pf_dim

    key = jax.random.PRNGKey(0)
    k_src, k_mask, k_par = jax.random.split(key, 3)

    src = jax.random.normal(k_src, (B, S, H), jnp.float32)
    # padding mask: 1 = real token, 0 = pad (last two positions of batch 1 padded)
    src_mask = jnp.ones((B, 1, S), jnp.float32)
    src_mask = src_mask.at[1, 0, S - 2:].set(0.0)

    params = init_params(k_par, H, PF)

    out = encoder_layer(src, src_mask, params, n_heads=NH)
    out = jax.block_until_ready(out)

    ref = encoder_layer_ref(src, src_mask, params, n_heads=NH)
    assert out.shape == (B, S, H)
    # bf16 matmul operands + approx reciprocal in the kernel -> loose tolerance vs f32 ref
    assert jnp.allclose(out, ref, rtol=5e-2, atol=5e-2), \
        f"max abs diff {float(jnp.max(jnp.abs(out - ref)))}"

    print("KERNEL_OK")
</pallas_src>

<mosaic_0001>
module attributes {stable_mosaic.version = 11 : i64} {
  func.func @encoder_layer_kernel(%arg0: i32, %arg1: i32, %arg2: memref<1x8x32xf32, #tpu.memory_space<vmem>>, %arg3: memref<1x8x32xbf16, #tpu.memory_space<vmem>>, %arg4: memref<1x1x8xf32, #tpu.memory_space<vmem>>, %arg5: memref<32x32xbf16, #tpu.memory_space<vmem>>, %arg6: memref<1x32xf32, #tpu.memory_space<vmem>>, %arg7: memref<32x64xbf16, #tpu.memory_space<vmem>>, %arg8: memref<1x64xf32, #tpu.memory_space<vmem>>, %arg9: memref<32x32xbf16, #tpu.memory_space<vmem>>, %arg10: memref<1x32xf32, #tpu.memory_space<vmem>>, %arg11: memref<1x32xf32, #tpu.memory_space<vmem>>, %arg12: memref<1x32xf32, #tpu.memory_space<vmem>>, %arg13: memref<32x64xbf16, #tpu.memory_space<vmem>>, %arg14: memref<1x64xf32, #tpu.memory_space<vmem>>, %arg15: memref<64x32xbf16, #tpu.memory_space<vmem>>, %arg16: memref<1x32xf32, #tpu.memory_space<vmem>>, %arg17: memref<1x32xf32, #tpu.memory_space<vmem>>, %arg18: memref<1x32xf32, #tpu.memory_space<vmem>>, %arg19: memref<1x8x32xf32, #tpu.memory_space<vmem>>, %arg20: memref<8x32xbf16, #tpu.memory_space<vmem>>, %arg21: memref<8x32xbf16, #tpu.memory_space<vmem>>, %arg22: memref<8x32xf32, #tpu.memory_space<vmem>>) attributes {dimension_semantics = [#tpu.dimension_semantics<parallel>, #tpu.dimension_semantics<arbitrary>], iteration_bounds = array<i64: 2, 1>, scalar_prefetch = 0 : i64, scratch_operands = 3 : i64, tpu.core_type = #tpu.core_type<tc>, window_params = [{transform_indices = @transform_0, window_bounds = array<i64: 1, 8, 32>}, {transform_indices = @transform_1, window_bounds = array<i64: 1, 8, 32>}, {transform_indices = @transform_2, window_bounds = array<i64: 1, 1, 8>}, {pipeline_mode = #tpu.pipeline_mode<synchronous>, transform_indices = @transform_3, window_bounds = array<i64: 32, 32>}, {pipeline_mode = #tpu.pipeline_mode<synchronous>, transform_indices = @transform_4, window_bounds = array<i64: 1, 32>}, {pipeline_mode = #tpu.pipeline_mode<synchronous>, transform_indices = @transform_5, window_bounds = array<i64: 32, 64>}, {pipeline_mode = #tpu.pipeline_mode<synchronous>, transform_indices = @transform_6, window_bounds = array<i64: 1, 64>}, {pipeline_mode = #tpu.pipeline_mode<synchronous>, transform_indices = @transform_7, window_bounds = array<i64: 32, 32>}, {pipeline_mode = #tpu.pipeline_mode<synchronous>, transform_indices = @transform_8, window_bounds = array<i64: 1, 32>}, {pipeline_mode = #tpu.pipeline_mode<synchronous>, transform_indices = @transform_9, window_bounds = array<i64: 1, 32>}, {pipeline_mode = #tpu.pipeline_mode<synchronous>, transform_indices = @transform_10, window_bounds = array<i64: 1, 32>}, {pipeline_mode = #tpu.pipeline_mode<synchronous>, transform_indices = @transform_11, window_bounds = array<i64: 32, 64>}, {pipeline_mode = #tpu.pipeline_mode<synchronous>, transform_indices = @transform_12, window_bounds = array<i64: 1, 64>}, {pipeline_mode = #tpu.pipeline_mode<synchronous>, transform_indices = @transform_13, window_bounds = array<i64: 64, 32>}, {pipeline_mode = #tpu.pipeline_mode<synchronous>, transform_indices = @transform_14, window_bounds = array<i64: 1, 32>}, {pipeline_mode = #tpu.pipeline_mode<synchronous>, transform_indices = @transform_15, window_bounds = array<i64: 1, 32>}, {pipeline_mode = #tpu.pipeline_mode<synchronous>, transform_indices = @transform_16, window_bounds = array<i64: 1, 32>}, {transform_indices = @transform_17, window_bounds = array<i64: 1, 8, 32>}]} {
    %c0 = arith.constant 0 : index
    %c0_0 = arith.constant 0 : index
    %c0_1 = arith.constant 0 : index
    %0 = vector.load %arg2[%c0, %c0_0, %c0_1] : memref<1x8x32xf32, #tpu.memory_space<vmem>>, vector<1x8x32xf32>
    %1 = vector.shape_cast %0 : vector<1x8x32xf32> to vector<8x32xf32>
    %c0_i32 = arith.constant 0 : i32
    %2 = arith.cmpi eq, %arg1, %c0_i32 : i32
    %3 = arith.extui %2 : i1 to i32
    %c0_i32_2 = arith.constant 0 : i32
    %4 = arith.cmpi ne, %3, %c0_i32_2 : i32
    scf.if %4 {
      %c0_74 = arith.constant 0 : index
      %c0_75 = arith.constant 0 : index
      %c0_76 = arith.constant 0 : index
      %164 = vector.load %arg3[%c0_74, %c0_75, %c0_76] : memref<1x8x32xbf16, #tpu.memory_space<vmem>>, vector<1x8x32xbf16>
      %165 = vector.shape_cast %164 : vector<1x8x32xbf16> to vector<8x32xbf16>
      %c0_77 = arith.constant 0 : index
      %c0_78 = arith.constant 0 : index
      %166 = vector.load %arg7[%c0_77, %c0_78] : memref<32x64xbf16, #tpu.memory_space<vmem>>, vector<32x64xbf16>
      %cst_79 = arith.constant dense<0.000000e+00> : vector<8x64xf32>
      %167 = tpu.matmul %165, %166, %cst_79 {dimension_numbers = #tpu.dot_dimension_numbers<[1], [0], [0], [1], [0, 0, 1, 1], [], []>} : vector<8x32xbf16>, vector<32x64xbf16>, vector<8x64xf32> -> vector<8x64xf32>
      %c0_80 = arith.constant 0 : index
      %c0_81 = arith.constant 0 : index
      %168 = vector.load %arg8[%c0_80, %c0_81] : memref<1x64xf32, #tpu.memory_space<vmem>>, vector<1x64xf32>
      %169 = vector.broadcast %168 : vector<1x64xf32> to vector<8x64xf32>
      %170 = arith.addf %167, %169 : vector<8x64xf32>
      %171 = vector.extract_strided_slice %170 {offsets = [0, 0], sizes = [8, 32], strides = [1, 1]} : vector<8x64xf32> to vector<8x32xf32>
      %172 = arith.truncf %171 : vector<8x32xf32> to vector<8x32xbf16>
      %c0_82 = arith.constant 0 : index
      %c0_83 = arith.constant 0 : index
      %173 = vector.load %arg20[%c0_82, %c0_83] : memref<8x32xbf16, #tpu.memory_space<vmem>>, vector<8x32xbf16>
      tpu.vector_store %arg20[%c0_82, %c0_83], %172 {strides = array<i32>} : memref<8x32xbf16, #tpu.memory_space<vmem>>, vector<8x32xbf16>,
      %174 = vector.extract_strided_slice %170 {offsets = [0, 32], sizes = [8, 32], strides = [1, 1]} : vector<8x64xf32> to vector<8x32xf32>
      %175 = arith.truncf %174 : vector<8x32xf32> to vector<8x32xbf16>
      %c0_84 = arith.constant 0 : index
      %c0_85 = arith.constant 0 : index
      %176 = vector.load %arg21[%c0_84, %c0_85] : memref<8x32xbf16, #tpu.memory_space<vmem>>, vector<8x32xbf16>
      tpu.vector_store %arg21[%c0_84, %c0_85], %175 {strides = array<i32>} : memref<8x32xbf16, #tpu.memory_space<vmem>>, vector<8x32xbf16>,
    } else {
    }
    %5 = arith.truncf %1 : vector<8x32xf32> to vector<8x32xbf16>
    %c0_3 = arith.constant 0 : index
    %c0_4 = arith.constant 0 : index
    %6 = vector.load %arg5[%c0_3, %c0_4] : memref<32x32xbf16, #tpu.memory_space<vmem>>, vector<32x32xbf16>
    %cst = arith.constant dense<0.000000e+00> : vector<8x32xf32>
    %7 = tpu.matmul %5, %6, %cst {dimension_numbers = #tpu.dot_dimension_numbers<[1], [0], [0], [1], [0, 0, 1, 1], [], []>} : vector<8x32xbf16>, vector<32x32xbf16>, vector<8x32xf32> -> vector<8x32xf32>
    %c0_5 = arith.constant 0 : index
    %c0_6 = arith.constant 0 : index
    %8 = vector.load %arg6[%c0_5, %c0_6] : memref<1x32xf32, #tpu.memory_space<vmem>>, vector<1x32xf32>
    %9 = vector.broadcast %8 : vector<1x32xf32> to vector<8x32xf32>
    %10 = arith.addf %7, %9 : vector<8x32xf32>
    %11 = arith.truncf %10 : vector<8x32xf32> to vector<8x32xbf16>
    %c0_7 = arith.constant 0 : index
    %c0_8 = arith.constant 0 : index
    %12 = vector.load %arg20[%c0_7, %c0_8] : memref<8x32xbf16, #tpu.memory_space<vmem>>, vector<8x32xbf16>
    %c0_9 = arith.constant 0 : index
    %c0_10 = arith.constant 0 : index
    %13 = vector.load %arg21[%c0_9, %c0_10] : memref<8x32xbf16, #tpu.memory_space<vmem>>, vector<8x32xbf16>
    %c0_11 = arith.constant 0 : index
    %c0_12 = arith.constant 0 : index
    %c0_13 = arith.constant 0 : index
    %14 = vector.load %arg4[%c0_11, %c0_12, %c0_13] : memref<1x1x8xf32, #tpu.memory_space<vmem>>, vector<1x1x8xf32>
    %15 = vector.shape_cast %14 : vector<1x1x8xf32> to vector<1x8xf32>
    %16 = vector.shape_cast %15 : vector<1x8xf32> to vector<1x8xf32>
    %17 = vector.broadcast %16 : vector<1x8xf32> to vector<8x8xf32>
    %18 = vector.extract_strided_slice %11 {offsets = [0, 0], sizes = [8, 8], strides = [1, 1]} : vector<8x32xbf16> to vector<8x8xbf16>
    %19 = vector.extract_strided_slice %12 {offsets = [0, 0], sizes = [8, 8], strides = [1, 1]} : vector<8x32xbf16> to vector<8x8xbf16>
    %cst_14 = arith.constant dense<0.000000e+00> : vector<8x8xf32>
    %20 = tpu.matmul %18, %19, %cst_14 {dimension_numbers = #tpu.dot_dimension_numbers<[1], [1], [0], [0], [0, 0, 1, 0], [], []>} : vector<8x8xbf16>, vector<8x8xbf16>, vector<8x8xf32> -> vector<8x8xf32>
    %21 = arith.addf %20, %17 : vector<8x8xf32>
    %cst_15 = arith.constant dense<0xFF800000> : vector<8xf32>
    %22 = vector.multi_reduction <maximumf>, %21, %cst_15 [1] : vector<8x8xf32> to vector<8xf32>
    %23 = vector.shape_cast %22 : vector<8xf32> to vector<8x1xf32>
    %24 = vector.broadcast %23 : vector<8x1xf32> to vector<8x8xf32>
    %25 = arith.subf %21, %24 : vector<8x8xf32>
    %26 = math.exp %25 : vector<8x8xf32>
    %cst_16 = arith.constant dense<0.000000e+00> : vector<8xf32>
    %27 = vector.multi_reduction <add>, %26, %cst_16 [1] : vector<8x8xf32> to vector<8xf32>
    %28 = vector.shape_cast %27 : vector<8xf32> to vector<8x1xf32>
    %29 = arith.truncf %26 : vector<8x8xf32> to vector<8x8xbf16>
    %30 = vector.extract_strided_slice %13 {offsets = [0, 0], sizes = [8, 8], strides = [1, 1]} : vector<8x32xbf16> to vector<8x8xbf16>
    %cst_17 = arith.constant dense<0.000000e+00> : vector<8x8xf32>
    %31 = tpu.matmul %29, %30, %cst_17 {dimension_numbers = #tpu.dot_dimension_numbers<[1], [0], [0], [1], [0, 0, 1, 1], [], []>} : vector<8x8xbf16>, vector<8x8xbf16>, vector<8x8xf32> -> vector<8x8xf32>
    %32 = tpu.reciprocal %28 {approx = true} : vector<8x1xf32> -> vector<8x1xf32>
    %33 = vector.broadcast %32 : vector<8x1xf32> to vector<8x8xf32>
    %34 = arith.mulf %31, %33 : vector<8x8xf32>
    %c0_18 = arith.constant 0 : index
    %c0_19 = arith.constant 0 : index
    %35 = vector.load %arg22[%c0_18, %c0_19] : memref<8x32xf32, #tpu.memory_space<vmem>>, vector<8x8xf32>
    tpu.vector_store %arg22[%c0_18, %c0_19], %34 {strides = array<i32>} : memref<8x32xf32, #tpu.memory_space<vmem>>, vector<8x8xf32>,
    %36 = vector.extract_strided_slice %11 {offsets = [0, 8], sizes = [8, 8], strides = [1, 1]} : vector<8x32xbf16> to vector<8x8xbf16>
    %37 = vector.extract_strided_slice %12 {offsets = [0, 8], sizes = [8, 8], strides = [1, 1]} : vector<8x32xbf16> to vector<8x8xbf16>
    %cst_20 = arith.constant dense<0.000000e+00> : vector<8x8xf32>
    %38 = tpu.matmul %36, %37, %cst_20 {dimension_numbers = #tpu.dot_dimension_numbers<[1], [1], [0], [0], [0, 0, 1, 0], [], []>} : vector<8x8xbf16>, vector<8x8xbf16>, vector<8x8xf32> -> vector<8x8xf32>
    %39 = arith.addf %38, %17 : vector<8x8xf32>
    %cst_21 = arith.constant dense<0xFF800000> : vector<8xf32>
    %40 = vector.multi_reduction <maximumf>, %39, %cst_21 [1] : vector<8x8xf32> to vector<8xf32>
    %41 = vector.shape_cast %40 : vector<8xf32> to vector<8x1xf32>
    %42 = vector.broadcast %41 : vector<8x1xf32> to vector<8x8xf32>
    %43 = arith.subf %39, %42 : vector<8x8xf32>
    %44 = math.exp %43 : vector<8x8xf32>
    %cst_22 = arith.constant dense<0.000000e+00> : vector<8xf32>
    %45 = vector.multi_reduction <add>, %44, %cst_22 [1] : vector<8x8xf32> to vector<8xf32>
    %46 = vector.shape_cast %45 : vector<8xf32> to vector<8x1xf32>
    %47 = arith.truncf %44 : vector<8x8xf32> to vector<8x8xbf16>
    %48 = vector.extract_strided_slice %13 {offsets = [0, 8], sizes = [8, 8], strides = [1, 1]} : vector<8x32xbf16> to vector<8x8xbf16>
    %cst_23 = arith.constant dense<0.000000e+00> : vector<8x8xf32>
    %49 = tpu.matmul %47, %48, %cst_23 {dimension_numbers = #tpu.dot_dimension_numbers<[1], [0], [0], [1], [0, 0, 1, 1], [], []>} : vector<8x8xbf16>, vector<8x8xbf16>, vector<8x8xf32> -> vector<8x8xf32>
    %50 = tpu.reciprocal %46 {approx = true} : vector<8x1xf32> -> vector<8x1xf32>
    %51 = vector.broadcast %50 : vector<8x1xf32> to vector<8x8xf32>
    %52 = arith.mulf %49, %51 : vector<8x8xf32>
    %c0_24 = arith.constant 0 : index
    %c8 = arith.constant 8 : index
    %53 = vector.load %arg22[%c0_24, %c8] : memref<8x32xf32, #tpu.memory_space<vmem>>, vector<8x8xf32>
    tpu.vector_store %arg22[%c0_24, %c8], %52 {strides = array<i32>} : memref<8x32xf32, #tpu.memory_space<vmem>>, vector<8x8xf32>,
    %54 = vector.extract_strided_slice %11 {offsets = [0, 16], sizes = [8, 8], strides = [1, 1]} : vector<8x32xbf16> to vector<8x8xbf16>
    %55 = vector.extract_strided_slice %12 {offsets = [0, 16], sizes = [8, 8], strides = [1, 1]} : vector<8x32xbf16> to vector<8x8xbf16>
    %cst_25 = arith.constant dense<0.000000e+00> : vector<8x8xf32>
    %56 = tpu.matmul %54, %55, %cst_25 {dimension_numbers = #tpu.dot_dimension_numbers<[1], [1], [0], [0], [0, 0, 1, 0], [], []>} : vector<8x8xbf16>, vector<8x8xbf16>, vector<8x8xf32> -> vector<8x8xf32>
    %57 = arith.addf %56, %17 : vector<8x8xf32>
    %cst_26 = arith.constant dense<0xFF800000> : vector<8xf32>
    %58 = vector.multi_reduction <maximumf>, %57, %cst_26 [1] : vector<8x8xf32> to vector<8xf32>
    %59 = vector.shape_cast %58 : vector<8xf32> to vector<8x1xf32>
    %60 = vector.broadcast %59 : vector<8x1xf32> to vector<8x8xf32>
    %61 = arith.subf %57, %60 : vector<8x8xf32>
    %62 = math.exp %61 : vector<8x8xf32>
    %cst_27 = arith.constant dense<0.000000e+00> : vector<8xf32>
    %63 = vector.multi_reduction <add>, %62, %cst_27 [1] : vector<8x8xf32> to vector<8xf32>
    %64 = vector.shape_cast %63 : vector<8xf32> to vector<8x1xf32>
    %65 = arith.truncf %62 : vector<8x8xf32> to vector<8x8xbf16>
    %66 = vector.extract_strided_slice %13 {offsets = [0, 16], sizes = [8, 8], strides = [1, 1]} : vector<8x32xbf16> to vector<8x8xbf16>
    %cst_28 = arith.constant dense<0.000000e+00> : vector<8x8xf32>
    %67 = tpu.matmul %65, %66, %cst_28 {dimension_numbers = #tpu.dot_dimension_numbers<[1], [0], [0], [1], [0, 0, 1, 1], [], []>} : vector<8x8xbf16>, vector<8x8xbf16>, vector<8x8xf32> -> vector<8x8xf32>
    %68 = tpu.reciprocal %64 {approx = true} : vector<8x1xf32> -> vector<8x1xf32>
    %69 = vector.broadcast %68 : vector<8x1xf32> to vector<8x8xf32>
    %70 = arith.mulf %67, %69 : vector<8x8xf32>
    %c0_29 = arith.constant 0 : index
    %c16 = arith.constant 16 : index
    %71 = vector.load %arg22[%c0_29, %c16] : memref<8x32xf32, #tpu.memory_space<vmem>>, vector<8x8xf32>
    tpu.vector_store %arg22[%c0_29, %c16], %70 {strides = array<i32>} : memref<8x32xf32, #tpu.memory_space<vmem>>, vector<8x8xf32>,
    %72 = vector.extract_strided_slice %11 {offsets = [0, 24], sizes = [8, 8], strides = [1, 1]} : vector<8x32xbf16> to vector<8x8xbf16>
    %73 = vector.extract_strided_slice %12 {offsets = [0, 24], sizes = [8, 8], strides = [1, 1]} : vector<8x32xbf16> to vector<8x8xbf16>
    %cst_30 = arith.constant dense<0.000000e+00> : vector<8x8xf32>
    %74 = tpu.matmul %72, %73, %cst_30 {dimension_numbers = #tpu.dot_dimension_numbers<[1], [1], [0], [0], [0, 0, 1, 0], [], []>} : vector<8x8xbf16>, vector<8x8xbf16>, vector<8x8xf32> -> vector<8x8xf32>
    %75 = arith.addf %74, %17 : vector<8x8xf32>
    %cst_31 = arith.constant dense<0xFF800000> : vector<8xf32>
    %76 = vector.multi_reduction <maximumf>, %75, %cst_31 [1] : vector<8x8xf32> to vector<8xf32>
    %77 = vector.shape_cast %76 : vector<8xf32> to vector<8x1xf32>
    %78 = vector.broadcast %77 : vector<8x1xf32> to vector<8x8xf32>
    %79 = arith.subf %75, %78 : vector<8x8xf32>
    %80 = math.exp %79 : vector<8x8xf32>
    %cst_32 = arith.constant dense<0.000000e+00> : vector<8xf32>
    %81 = vector.multi_reduction <add>, %80, %cst_32 [1] : vector<8x8xf32> to vector<8xf32>
    %82 = vector.shape_cast %81 : vector<8xf32> to vector<8x1xf32>
    %83 = arith.truncf %80 : vector<8x8xf32> to vector<8x8xbf16>
    %84 = vector.extract_strided_slice %13 {offsets = [0, 24], sizes = [8, 8], strides = [1, 1]} : vector<8x32xbf16> to vector<8x8xbf16>
    %cst_33 = arith.constant dense<0.000000e+00> : vector<8x8xf32>
    %85 = tpu.matmul %83, %84, %cst_33 {dimension_numbers = #tpu.dot_dimension_numbers<[1], [0], [0], [1], [0, 0, 1, 1], [], []>} : vector<8x8xbf16>, vector<8x8xbf16>, vector<8x8xf32> -> vector<8x8xf32>
    %86 = tpu.reciprocal %82 {approx = true} : vector<8x1xf32> -> vector<8x1xf32>
    %87 = vector.broadcast %86 : vector<8x1xf32> to vector<8x8xf32>
    %88 = arith.mulf %85, %87 : vector<8x8xf32>
    %c0_34 = arith.constant 0 : index
    %c24 = arith.constant 24 : index
    %89 = vector.load %arg22[%c0_34, %c24] : memref<8x32xf32, #tpu.memory_space<vmem>>, vector<8x8xf32>
    tpu.vector_store %arg22[%c0_34, %c24], %88 {strides = array<i32>} : memref<8x32xf32, #tpu.memory_space<vmem>>, vector<8x8xf32>,
    %c0_35 = arith.constant 0 : index
    %c0_36 = arith.constant 0 : index
    %90 = vector.load %arg22[%c0_35, %c0_36] : memref<8x32xf32, #tpu.memory_space<vmem>>, vector<8x32xf32>
    %91 = arith.truncf %90 : vector<8x32xf32> to vector<8x32xbf16>
    %c0_37 = arith.constant 0 : index
    %c0_38 = arith.constant 0 : index
    %92 = vector.load %arg9[%c0_37, %c0_38] : memref<32x32xbf16, #tpu.memory_space<vmem>>, vector<32x32xbf16>
    %cst_39 = arith.constant dense<0.000000e+00> : vector<8x32xf32>
    %93 = tpu.matmul %91, %92, %cst_39 {dimension_numbers = #tpu.dot_dimension_numbers<[1], [0], [0], [1], [0, 0, 1, 1], [], []>} : vector<8x32xbf16>, vector<32x32xbf16>, vector<8x32xf32> -> vector<8x32xf32>
    %c0_40 = arith.constant 0 : index
    %c0_41 = arith.constant 0 : index
    %94 = vector.load %arg10[%c0_40, %c0_41] : memref<1x32xf32, #tpu.memory_space<vmem>>, vector<1x32xf32>
    %95 = vector.broadcast %94 : vector<1x32xf32> to vector<8x32xf32>
    %96 = arith.addf %93, %95 : vector<8x32xf32>
    %97 = arith.addf %1, %96 : vector<8x32xf32>
    %c0_42 = arith.constant 0 : index
    %c0_43 = arith.constant 0 : index
    %98 = vector.load %arg11[%c0_42, %c0_43] : memref<1x32xf32, #tpu.memory_space<vmem>>, vector<1x32xf32>
    %c0_44 = arith.constant 0 : index
    %c0_45 = arith.constant 0 : index
    %99 = vector.load %arg12[%c0_44, %c0_45] : memref<1x32xf32, #tpu.memory_space<vmem>>, vector<1x32xf32>
    %cst_46 = arith.constant dense<0.000000e+00> : vector<8xf32>
    %100 = vector.multi_reduction <add>, %97, %cst_46 [1] : vector<8x32xf32> to vector<8xf32>
    %101 = vector.shape_cast %100 : vector<8xf32> to vector<8x1xf32>
    %cst_47 = arith.constant 3.200000e+01 : f32
    %102 = vector.broadcast %cst_47 : f32 to vector<8x1xf32>
    %103 = arith.divf %101, %102 : vector<8x1xf32>
    %104 = vector.broadcast %103 : vector<8x1xf32> to vector<8x32xf32>
    %105 = arith.subf %97, %104 : vector<8x32xf32>
    %106 = arith.mulf %105, %105 : vector<8x32xf32>
    %cst_48 = arith.constant dense<0.000000e+00> : vector<8xf32>
    %107 = vector.multi_reduction <add>, %106, %cst_48 [1] : vector<8x32xf32> to vector<8xf32>
    %108 = vector.shape_cast %107 : vector<8xf32> to vector<8x1xf32>
    %cst_49 = arith.constant 3.200000e+01 : f32
    %109 = vector.broadcast %cst_49 : f32 to vector<8x1xf32>
    %110 = arith.divf %108, %109 : vector<8x1xf32>
    %111 = vector.broadcast %103 : vector<8x1xf32> to vector<8x32xf32>
    %112 = arith.subf %97, %111 : vector<8x32xf32>
    %cst_50 = arith.constant 9.99999974E-6 : f32
    %113 = vector.broadcast %cst_50 : f32 to vector<8x1xf32>
    %114 = arith.addf %110, %113 : vector<8x1xf32>
    %115 = math.rsqrt %114 : vector<8x1xf32>
    %116 = vector.broadcast %115 : vector<8x1xf32> to vector<8x32xf32>
    %117 = arith.mulf %112, %116 : vector<8x32xf32>
    %118 = vector.broadcast %98 : vector<1x32xf32> to vector<8x32xf32>
    %119 = arith.mulf %117, %118 : vector<8x32xf32>
    %120 = vector.broadcast %99 : vector<1x32xf32> to vector<8x32xf32>
    %121 = arith.addf %119, %120 : vector<8x32xf32>
    %122 = arith.truncf %121 : vector<8x32xf32> to vector<8x32xbf16>
    %c0_51 = arith.constant 0 : index
    %c0_52 = arith.constant 0 : index
    %123 = vector.load %arg13[%c0_51, %c0_52] : memref<32x64xbf16, #tpu.memory_space<vmem>>, vector<32x64xbf16>
    %cst_53 = arith.constant dense<0.000000e+00> : vector<8x64xf32>
    %124 = tpu.matmul %122, %123, %cst_53 {dimension_numbers = #tpu.dot_dimension_numbers<[1], [0], [0], [1], [0, 0, 1, 1], [], []>} : vector<8x32xbf16>, vector<32x64xbf16>, vector<8x64xf32> -> vector<8x64xf32>
    %c0_54 = arith.constant 0 : index
    %c0_55 = arith.constant 0 : index
    %125 = vector.load %arg14[%c0_54, %c0_55] : memref<1x64xf32, #tpu.memory_space<vmem>>, vector<1x64xf32>
    %126 = vector.broadcast %125 : vector<1x64xf32> to vector<8x64xf32>
    %127 = arith.addf %124, %126 : vector<8x64xf32>
    %cst_56 = arith.constant 0.000000e+00 : f32
    %128 = vector.broadcast %cst_56 : f32 to vector<8x64xf32>
    %129 = arith.maximumf %127, %128 : vector<8x64xf32>
    %130 = arith.truncf %129 : vector<8x64xf32> to vector<8x64xbf16>
    %c0_57 = arith.constant 0 : index
    %c0_58 = arith.constant 0 : index
    %131 = vector.load %arg15[%c0_57, %c0_58] : memref<64x32xbf16, #tpu.memory_space<vmem>>, vector<64x32xbf16>
    %cst_59 = arith.constant dense<0.000000e+00> : vector<8x32xf32>
    %132 = tpu.matmul %130, %131, %cst_59 {dimension_numbers = #tpu.dot_dimension_numbers<[1], [0], [0], [1], [0, 0, 1, 1], [], []>} : vector<8x64xbf16>, vector<64x32xbf16>, vector<8x32xf32> -> vector<8x32xf32>
    %c0_60 = arith.constant 0 : index
    %c0_61 = arith.constant 0 : index
    %133 = vector.load %arg16[%c0_60, %c0_61] : memref<1x32xf32, #tpu.memory_space<vmem>>, vector<1x32xf32>
    %134 = vector.broadcast %133 : vector<1x32xf32> to vector<8x32xf32>
    %135 = arith.addf %132, %134 : vector<8x32xf32>
    %136 = arith.addf %121, %135 : vector<8x32xf32>
    %c0_62 = arith.constant 0 : index
    %c0_63 = arith.constant 0 : index
    %137 = vector.load %arg17[%c0_62, %c0_63] : memref<1x32xf32, #tpu.memory_space<vmem>>, vector<1x32xf32>
    %c0_64 = arith.constant 0 : index
    %c0_65 = arith.constant 0 : index
    %138 = vector.load %arg18[%c0_64, %c0_65] : memref<1x32xf32, #tpu.memory_space<vmem>>, vector<1x32xf32>
    %cst_66 = arith.constant dense<0.000000e+00> : vector<8xf32>
    %139 = vector.multi_reduction <add>, %136, %cst_66 [1] : vector<8x32xf32> to vector<8xf32>
    %140 = vector.shape_cast %139 : vector<8xf32> to vector<8x1xf32>
    %cst_67 = arith.constant 3.200000e+01 : f32
    %141 = vector.broadcast %cst_67 : f32 to vector<8x1xf32>
    %142 = arith.divf %140, %141 : vector<8x1xf32>
    %143 = vector.broadcast %142 : vector<8x1xf32> to vector<8x32xf32>
    %144 = arith.subf %136, %143 : vector<8x32xf32>
    %145 = arith.mulf %144, %144 : vector<8x32xf32>
    %cst_68 = arith.constant dense<0.000000e+00> : vector<8xf32>
    %146 = vector.multi_reduction <add>, %145, %cst_68 [1] : vector<8x32xf32> to vector<8xf32>
    %147 = vector.shape_cast %146 : vector<8xf32> to vector<8x1xf32>
    %cst_69 = arith.constant 3.200000e+01 : f32
    %148 = vector.broadcast %cst_69 : f32 to vector<8x1xf32>
    %149 = arith.divf %147, %148 : vector<8x1xf32>
    %150 = vector.broadcast %142 : vector<8x1xf32> to vector<8x32xf32>
    %151 = arith.subf %136, %150 : vector<8x32xf32>
    %cst_70 = arith.constant 9.99999974E-6 : f32
    %152 = vector.broadcast %cst_70 : f32 to vector<8x1xf32>
    %153 = arith.addf %149, %152 : vector<8x1xf32>
    %154 = math.rsqrt %153 : vector<8x1xf32>
    %155 = vector.broadcast %154 : vector<8x1xf32> to vector<8x32xf32>
    %156 = arith.mulf %151, %155 : vector<8x32xf32>
    %157 = vector.broadcast %137 : vector<1x32xf32> to vector<8x32xf32>
    %158 = arith.mulf %156, %157 : vector<8x32xf32>
    %159 = vector.broadcast %138 : vector<1x32xf32> to vector<8x32xf32>
    %160 = arith.addf %158, %159 : vector<8x32xf32>
    %c0_71 = arith.constant 0 : index
    %c0_72 = arith.constant 0 : index
    %c0_73 = arith.constant 0 : index
    %161 = vector.load %arg19[%c0_71, %c0_72, %c0_73] : memref<1x8x32xf32, #tpu.memory_space<vmem>>, vector<1x8x32xf32>
    %162 = vector.shape_cast %161 : vector<1x8x32xf32> to vector<8x32xf32>
    %163 = vector.shape_cast %160 : vector<8x32xf32> to vector<1x8x32xf32>
    tpu.vector_store %arg19[%c0_71, %c0_72, %c0_73], %163 {strides = array<i32>} : memref<1x8x32xf32, #tpu.memory_space<vmem>>, vector<1x8x32xf32>,
    return
  }
  func.func @transform_0(%arg0: i32, %arg1: i32) -> (i32, i32, i32) {
    %c0_i32 = arith.constant 0 : i32
    %c0_i32_0 = arith.constant 0 : i32
    return %arg0, %arg1, %c0_i32 : i32, i32, i32
  }
  func.func @transform_1(%arg0: i32, %arg1: i32) -> (i32, i32, i32) {
    %c0_i32 = arith.constant 0 : i32
    %c0_i32_0 = arith.constant 0 : i32
    %c0_i32_1 = arith.constant 0 : i32
    return %arg0, %c0_i32, %c0_i32_0 : i32, i32, i32
  }
  func.func @transform_2(%arg0: i32, %arg1: i32) -> (i32, i32, i32) {
    %c0_i32 = arith.constant 0 : i32
    %c0_i32_0 = arith.constant 0 : i32
    %c0_i32_1 = arith.constant 0 : i32
    return %arg0, %c0_i32, %c0_i32_0 : i32, i32, i32
  }
  func.func @transform_3(%arg0: i32, %arg1: i32) -> (i32, i32) {
    %c0_i32 = arith.constant 0 : i32
    %c0_i32_0 = arith.constant 0 : i32
    %c0_i32_1 = arith.constant 0 : i32
    return %c0_i32, %c0_i32_0 : i32, i32
  }
  func.func @transform_4(%arg0: i32, %arg1: i32) -> (i32, i32) {
    %c0_i32 = arith.constant 0 : i32
    %c0_i32_0 = arith.constant 0 : i32
    %c0_i32_1 = arith.constant 0 : i32
    return %c0_i32, %c0_i32_0 : i32, i32
  }
  func.func @transform_5(%arg0: i32, %arg1: i32) -> (i32, i32) {
    %c0_i32 = arith.constant 0 : i32
    %c0_i32_0 = arith.constant 0 : i32
    %c0_i32_1 = arith.constant 0 : i32
    return %c0_i32, %c0_i32_0 : i32, i32
  }
  func.func @transform_6(%arg0: i32, %arg1: i32) -> (i32, i32) {
    %c0_i32 = arith.constant 0 : i32
    %c0_i32_0 = arith.constant 0 : i32
    %c0_i32_1 = arith.constant 0 : i32
    return %c0_i32, %c0_i32_0 : i32, i32
  }
  func.func @transform_7(%arg0: i32, %arg1: i32) -> (i32, i32) {
    %c0_i32 = arith.constant 0 : i32
    %c0_i32_0 = arith.constant 0 : i32
    %c0_i32_1 = arith.constant 0 : i32
    return %c0_i32, %c0_i32_0 : i32, i32
  }
  func.func @transform_8(%arg0: i32, %arg1: i32) -> (i32, i32) {
    %c0_i32 = arith.constant 0 : i32
    %c0_i32_0 = arith.constant 0 : i32
    %c0_i32_1 = arith.constant 0 : i32
    return %c0_i32, %c0_i32_0 : i32, i32
  }
  func.func @transform_9(%arg0: i32, %arg1: i32) -> (i32, i32) {
    %c0_i32 = arith.constant 0 : i32
    %c0_i32_0 = arith.constant 0 : i32
    %c0_i32_1 = arith.constant 0 : i32
    return %c0_i32, %c0_i32_0 : i32, i32
  }
  func.func @transform_10(%arg0: i32, %arg1: i32) -> (i32, i32) {
    %c0_i32 = arith.constant 0 : i32
    %c0_i32_0 = arith.constant 0 : i32
    %c0_i32_1 = arith.constant 0 : i32
    return %c0_i32, %c0_i32_0 : i32, i32
  }
  func.func @transform_11(%arg0: i32, %arg1: i32) -> (i32, i32) {
    %c0_i32 = arith.constant 0 : i32
    %c0_i32_0 = arith.constant 0 : i32
    %c0_i32_1 = arith.constant 0 : i32
    return %c0_i32, %c0_i32_0 : i32, i32
  }
  func.func @transform_12(%arg0: i32, %arg1: i32) -> (i32, i32) {
    %c0_i32 = arith.constant 0 : i32
    %c0_i32_0 = arith.constant 0 : i32
    %c0_i32_1 = arith.constant 0 : i32
    return %c0_i32, %c0_i32_0 : i32, i32
  }
  func.func @transform_13(%arg0: i32, %arg1: i32) -> (i32, i32) {
    %c0_i32 = arith.constant 0 : i32
    %c0_i32_0 = arith.constant 0 : i32
    %c0_i32_1 = arith.constant 0 : i32
    return %c0_i32, %c0_i32_0 : i32, i32
  }
  func.func @transform_14(%arg0: i32, %arg1: i32) -> (i32, i32) {
    %c0_i32 = arith.constant 0 : i32
    %c0_i32_0 = arith.constant 0 : i32
    %c0_i32_1 = arith.constant 0 : i32
    return %c0_i32, %c0_i32_0 : i32, i32
  }
  func.func @transform_15(%arg0: i32, %arg1: i32) -> (i32, i32) {
    %c0_i32 = arith.constant 0 : i32
    %c0_i32_0 = arith.constant 0 : i32
    %c0_i32_1 = arith.constant 0 : i32
    return %c0_i32, %c0_i32_0 : i32, i32
  }
  func.func @transform_16(%arg0: i32, %arg1: i32) -> (i32, i32) {
    %c0_i32 = arith.constant 0 : i32
    %c0_i32_0 = arith.constant 0 : i32
    %c0_i32_1 = arith.constant 0 : i32
    return %c0_i32, %c0_i32_0 : i32, i32
  }
  func.func @transform_17(%arg0: i32, %arg1: i32) -> (i32, i32, i32) {
    %c0_i32 = arith.constant 0 : i32
    %c0_i32_0 = arith.constant 0 : i32
    return %arg0, %arg1, %c0_i32 : i32, i32, i32
  }
}

</mosaic_0001>

<llo_original>
// kernel: tpu_custom_call.1
$region0: #{tpu_custom_call.1}
  #allocation0 [shape = 'u32[]', space=smem, size = 0x4, offset = 0x4, fixed_abs, tag = 'smem constant byte address 0x4 - core index']
  #allocation1 [shape = 'u32[144,128]{1,0:T(1,128)}', space=vmem, size = 0x12000, scoped, tag = 'internal scratch']
  #allocation2 [shape = 'bf16[8,32]{1,0:T(8,128)(2,1)}', space=vmem, size = 0x800, scoped, tag = 'scratch operand']
  #allocation3 [shape = 'bf16[8,32]{1,0:T(8,128)(2,1)}', space=vmem, size = 0x800, scoped, tag = 'scratch operand']
  #allocation4 [shape = 'f32[8,32]{1,0:T(8,128)}', space=vmem, size = 0x1000, scoped, tag = 'scratch operand']
  %s0 = inlined_call_operand.vmem [shape: f32[2,8,32], index: 0, kind: input, shape index: {}]
  %s1 = inlined_call_operand.hbm [shape: bf16[2,8,32], index: 1, kind: input, shape index: {}]
  %s2 = inlined_call_operand.vmem [shape: f32[2,1,8], index: 2, kind: input, shape index: {}]
  %s3 = inlined_call_operand.vmem [shape: bf16[32,32], index: 3, kind: input, shape index: {}]
  %s4 = inlined_call_operand.hbm [shape: f32[1,32], index: 4, kind: input, shape index: {}]
  %s5 = inlined_call_operand.vmem [shape: bf16[32,64], index: 5, kind: input, shape index: {}]
  %s6 = inlined_call_operand.hbm [shape: f32[1,64], index: 6, kind: input, shape index: {}]
  %s7 = inlined_call_operand.hbm [shape: bf16[32,32], index: 7, kind: input, shape index: {}]
  %s8 = inlined_call_operand.hbm [shape: f32[1,32], index: 8, kind: input, shape index: {}]
  %s9 = inlined_call_operand.hbm [shape: f32[1,32], index: 9, kind: input, shape index: {}]
  %s10 = inlined_call_operand.vmem [shape: f32[1,32], index: 10, kind: input, shape index: {}]
  %s11 = inlined_call_operand.vmem [shape: bf16[32,64], index: 11, kind: input, shape index: {}]
  %s12 = inlined_call_operand.vmem [shape: f32[1,64], index: 12, kind: input, shape index: {}]
  %s13 = inlined_call_operand.vmem [shape: bf16[64,32], index: 13, kind: input, shape index: {}]
  %s14 = inlined_call_operand.vmem [shape: f32[1,32], index: 14, kind: input, shape index: {}]
  %s15 = inlined_call_operand.vmem [shape: f32[1,32], index: 15, kind: input, shape index: {}]
  %s16 = inlined_call_operand.vmem [shape: f32[1,32], index: 16, kind: input, shape index: {}]
  %s17 = inlined_call_operand.hbm [shape: f32[2,8,32], index: 17, kind: output, shape index: {}]
  %s18 = sld [smem:[#allocation0]]
  $region129: #{tpu_custom_call.1} parent=0
    _
  %s20 = ssub.s32 1, %s18
  %s21 = scalar_select 0, %s20, %s18
  $region1: #{tpu_custom_call.1} parent=0
    #allocation5 [shape = 'u8[4096]{0}', space=vmem, size = 0x1000, scoped, tag = 'input window, operand 1']
    #allocation6 [shape = 's32[2]{0}', space=sflag, size = 0x8, scoped, tag = 'scoped memory for tpu_custom_call.1']
    #allocation7 [shape = 's32[2]{0}', space=sflag, size = 0x8, scoped, tag = 'scoped memory for tpu_custom_call.1']
    #allocation8 [shape = 'u8[512]{0}', space=vmem, size = 0x400, scoped, tag = 'input window, operand 4, single buffered']
    #allocation9 [shape = 's32[1]{0}', space=sflag, size = 0x4, scoped, tag = 'scoped memory for tpu_custom_call.1']
    #allocation10 [shape = 'u8[512]{0}', space=vmem, size = 0x400, scoped, tag = 'input window, operand 6, single buffered']
    #allocation11 [shape = 'u8[8192]{0}', space=vmem, size = 0x2000, scoped, tag = 'input window, operand 7, single buffered']
    #allocation12 [shape = 's32[1]{0}', space=sflag, size = 0x4, scoped, tag = 'scoped memory for tpu_custom_call.1']
    #allocation13 [shape = 'u8[512]{0}', space=vmem, size = 0x400, scoped, tag = 'input window, operand 8, single buffered']
    #allocation14 [shape = 'u8[512]{0}', space=vmem, size = 0x400, scoped, tag = 'input window, operand 9, single buffered']
    #allocation15 [shape = 's32[1]{0}', space=sflag, size = 0x4, scoped, tag = 'scoped memory for tpu_custom_call.1']
    #allocation16 [shape = 'u8[8192]{0}', space=vmem, size = 0x2000, scoped, tag = 'output window, operand 0']
    %22 = vsyncpa [#allocation6], 0
    %s23 = scalar_lea.sflag [#allocation6], 1
    %24 = vsyncpa %s23, 0
    %25 = vsyncpa [#allocation9], 0
    %26 = vsyncpa [#allocation12], 0
    %27 = vsyncpa [#allocation15], 0
    %28 = vsyncpa [#allocation7], 0
    %s29 = scalar_lea.sflag [#allocation7], 1
    %30 = vsyncpa %s29, 0
    loop: start=0, step=1, limit=4
    $region2: #{tpu_custom_call.1} parent=1 // loop_pre_header
      _
    $region3: #{tpu_custom_call.1} parent=1 // loop_header
      %s32 = sphi 0, %s36
      %p33 = scmp.ge.s32.totalorder %s32, 4
      %s39 = sphi 0, %s51
      %s40 = sphi 0, %s47
      %s41 = sphi 0, %s39
      %s42 = sphi 0, %s40
      %s43 = sphi 0, %s41
      %s44 = sphi 0, %s42
      %s56 = sphi 0, %s58
      %s59 = sphi 0, %s56
      %s60 = sphi 0, %s59
      %s76 = sphi 0, %s60
      %s82 = sphi 0, %s84
      %s85 = sphi 0, %s82
      %s86 = sphi 0, %s85
      %s102 = sphi 0, %s86
      %s108 = sphi 0, %s110
      %s111 = sphi 0, %s108
      %s112 = sphi 0, %s111
      %s128 = sphi 0, %s112
      %s132 = sphi 0, %s132
      %s134 = sphi 0, %s132
      %s135 = sphi 0, %s134
      %s149 = sphi 0, %s135
      %s153 = sphi 0, %s153
      %s155 = sphi 0, %s153
      %s156 = sphi 0, %s155
      %s170 = sphi 0, %s156
      %s174 = sphi 0, %s174
      %s176 = sphi 0, %s174
      %s177 = sphi 0, %s176
      %s191 = sphi 0, %s177
      %s195 = sphi 0, %s195
      %s197 = sphi 0, %s195
      %s198 = sphi 0, %s197
      %s212 = sphi 0, %s198
      %s216 = sphi 0, %s216
      %s218 = sphi 0, %s216
      %s219 = sphi 0, %s218
      %s233 = sphi 0, %s219
      %s237 = sphi 0, %s237
      %s239 = sphi 0, %s237
      %s240 = sphi 0, %s239
      %s254 = sphi 0, %s240
      %s258 = sphi 0, %s258
      %s260 = sphi 0, %s258
      %s261 = sphi 0, %s260
      %s275 = sphi 0, %s261
      %s279 = sphi 0, %s279
      %s281 = sphi 0, %s279
      %s282 = sphi 0, %s281
      %s296 = sphi 0, %s282
      %s300 = sphi 0, %s300
      %s302 = sphi 0, %s300
      %s303 = sphi 0, %s302
      %s317 = sphi 0, %s303
      %s321 = sphi 0, %s321
      %s323 = sphi 0, %s321
      %s324 = sphi 0, %s323
      %s338 = sphi 0, %s324
      %s342 = sphi 0, %s342
      %s344 = sphi 0, %s342
      %s345 = sphi 0, %s344
      %s359 = sphi 0, %s345
      %s363 = sphi 0, %s363
      %s365 = sphi 0, %s363
      %s366 = sphi 0, %s365
      %s380 = sphi 0, %s366
      %s384 = sphi 0, %s384
      %s386 = sphi 0, %s384
      %s387 = sphi 0, %s386
      %s401 = sphi 0, %s387
      %s405 = sphi 0, %s405
      %s407 = sphi 0, %s405
      %s408 = sphi 0, %s407
      %s422 = sphi 0, %s408
      %s430 = sphi 0, %s432
      %s433 = sphi 0, %s430
      %s434 = sphi 0, %s433
      %s450 = sphi 0, %s434
    $region4: #{tpu_custom_call.1} parent=1 // loop_header_branch
      %35 = sbr.rel (%p33) target = $region8
    $region5: #{tpu_custom_call.1} parent=1 // loop_body
      %s37 = ssub.s32 %s32, 1
      %s38 = ssub.s32 %s32, 2
      %s45 = sadd.s32 1, %s40
      %p46 = scmp.ge.s32.totalorder %s45, 1
      %s47 = scalar_select %p46, 0, %s45
      %s48 = sadd.s32 1, %s39
      %s49 = scalar_select %p46, %s48, %s39
      %p50 = scmp.ge.s32.totalorder %s49, 2
      %s51 = scalar_select %p50, 0, %s49
      %s52 = ssub.s32 %s39, %s51
      %s53 = ssub.s32 %s40, %s47
      %s54 = sor.u32 %s52, %s53
      %p55 = scmp.eq.s32.totalorder %s54, 0
      %s57 = sadd.s32 %s56, 1
      %s58 = scalar_select %p55, %s56, %s57
      %p61 = pneg %p55
      %p62 = scmp.eq.s32.totalorder %s32, 1
      %p63 = por %p61, %p62
      %p64 = scmp.ne.s32.totalorder %s56, %s59
      %p65 = scmp.eq.s32.totalorder %s32, 0
      %p66 = por %p64, %p65
      %p67 = scmp.ne.s32.totalorder %s56, %s59
      %p68 = scmp.eq.s32.totalorder %s37, 1
      %p69 = por %p67, %p68
      %p70 = scmp.ne.s32.totalorder %s59, %s60
      %p71 = scmp.eq.s32.totalorder %s37, 0
      %p72 = por %p70, %p71
      %p73 = scmp.ne.s32.totalorder %s59, %s60
      %p74 = scmp.eq.s32.totalorder %s38, 1
      %p75 = por %p73, %p74
      %p77 = scmp.ne.s32.totalorder %s60, %s76
      %p78 = scmp.eq.s32.totalorder %s38, 0
      %p79 = por %p77, %p78
      %s80 = ssub.s32 %s39, %s51
      %p81 = scmp.eq.s32.totalorder %s80, 0
      %s83 = sadd.s32 %s82, 1
      %s84 = scalar_select %p81, %s82, %s83
      %p87 = pneg %p81
      %p88 = scmp.eq.s32.totalorder %s32, 1
      %p89 = por %p87, %p88
      %p90 = scmp.ne.s32.totalorder %s82, %s85
      %p91 = scmp.eq.s32.totalorder %s32, 0
      %p92 = por %p90, %p91
      %p93 = scmp.ne.s32.totalorder %s82, %s85
      %p94 = scmp.eq.s32.totalorder %s37, 1
      %p95 = por %p93, %p94
      %p96 = scmp.ne.s32.totalorder %s85, %s86
      %p97 = scmp.eq.s32.totalorder %s37, 0
      %p98 = por %p96, %p97
      %p99 = scmp.ne.s32.totalorder %s85, %s86
      %p100 = scmp.eq.s32.totalorder %s38, 1
      %p101 = por %p99, %p100
      %p103 = scmp.ne.s32.totalorder %s86, %s102
      %p104 = scmp.eq.s32.totalorder %s38, 0
      %p105 = por %p103, %p104
      %s106 = ssub.s32 %s39, %s51
      %p107 = scmp.eq.s32.totalorder %s106, 0
      %s109 = sadd.s32 %s108, 1
      %s110 = scalar_select %p107, %s108, %s109
      %p113 = pneg %p107
      %p114 = scmp.eq.s32.totalorder %s32, 1
      %p115 = por %p113, %p114
      %p116 = scmp.ne.s32.totalorder %s108, %s111
      %p117 = scmp.eq.s32.totalorder %s32, 0
      %p118 = por %p116, %p117
      %p119 = scmp.ne.s32.totalorder %s108, %s111
      %p120 = scmp.eq.s32.totalorder %s37, 1
      %p121 = por %p119, %p120
      %p122 = scmp.ne.s32.totalorder %s111, %s112
      %p123 = scmp.eq.s32.totalorder %s37, 0
      %p124 = por %p122, %p123
      %p125 = scmp.ne.s32.totalorder %s111, %s112
      %p126 = scmp.eq.s32.totalorder %s38, 1
      %p127 = por %p125, %p126
      %p129 = scmp.ne.s32.totalorder %s112, %s128
      %p130 = scmp.eq.s32.totalorder %s38, 0
      %p131 = por %p129, %p130
      %s133 = sadd.s32 %s132, 1
      %p136 = scmp.eq.s32.totalorder %s32, 1
      %p137 = scmp.ne.s32.totalorder %s132, %s134
      %p138 = scmp.eq.s32.totalorder %s32, 0
      %p139 = por %p137, %p138
      %p140 = scmp.ne.s32.totalorder %s132, %s134
      %p141 = scmp.eq.s32.totalorder %s37, 1
      %p142 = por %p140, %p141
      %p143 = scmp.ne.s32.totalorder %s134, %s135
      %p144 = scmp.eq.s32.totalorder %s37, 0
      %p145 = por %p143, %p144
      %p146 = scmp.ne.s32.totalorder %s134, %s135
      %p147 = scmp.eq.s32.totalorder %s38, 1
      %p148 = por %p146, %p147
      %p150 = scmp.ne.s32.totalorder %s135, %s149
      %p151 = scmp.eq.s32.totalorder %s38, 0
      %p152 = por %p150, %p151
      %s154 = sadd.s32 %s153, 1
      %p157 = scmp.eq.s32.totalorder %s32, 1
      %p158 = scmp.ne.s32.totalorder %s153, %s155
      %p159 = scmp.eq.s32.totalorder %s32, 0
      %p160 = por %p158, %p159
      %p161 = scmp.ne.s32.totalorder %s153, %s155
      %p162 = scmp.eq.s32.totalorder %s37, 1
      %p163 = por %p161, %p162
      %p164 = scmp.ne.s32.totalorder %s155, %s156
      %p165 = scmp.eq.s32.totalorder %s37, 0
      %p166 = por %p164, %p165
      %p167 = scmp.ne.s32.totalorder %s155, %s156
      %p168 = scmp.eq.s32.totalorder %s38, 1
      %p169 = por %p167, %p168
      %p171 = scmp.ne.s32.totalorder %s156, %s170
      %p172 = scmp.eq.s32.totalorder %s38, 0
      %p173 = por %p171, %p172
      %s175 = sadd.s32 %s174, 1
      %p178 = scmp.eq.s32.totalorder %s32, 1
      %p179 = scmp.ne.s32.totalorder %s174, %s176
      %p180 = scmp.eq.s32.totalorder %s32, 0
      %p181 = por %p179, %p180
      %p182 = scmp.ne.s32.totalorder %s174, %s176
      %p183 = scmp.eq.s32.totalorder %s37, 1
      %p184 = por %p182, %p183
      %p185 = scmp.ne.s32.totalorder %s176, %s177
      %p186 = scmp.eq.s32.totalorder %s37, 0
      %p187 = por %p185, %p186
      %p188 = scmp.ne.s32.totalorder %s176, %s177
      %p189 = scmp.eq.s32.totalorder %s38, 1
      %p190 = por %p188, %p189
      %p192 = scmp.ne.s32.totalorder %s177, %s191
      %p193 = scmp.eq.s32.totalorder %s38, 0
      %p194 = por %p192, %p193
      %s196 = sadd.s32 %s195, 1
      %p199 = scmp.eq.s32.totalorder %s32, 1
      %p200 = scmp.ne.s32.totalorder %s195, %s197
      %p201 = scmp.eq.s32.totalorder %s32, 0
      %p202 = por %p200, %p201
      %p203 = scmp.ne.s32.totalorder %s195, %s197
      %p204 = scmp.eq.s32.totalorder %s37, 1
      %p205 = por %p203, %p204
      %p206 = scmp.ne.s32.totalorder %s197, %s198
      %p207 = scmp.eq.s32.totalorder %s37, 0
      %p208 = por %p206, %p207
      %p209 = scmp.ne.s32.totalorder %s197, %s198
      %p210 = scmp.eq.s32.totalorder %s38, 1
      %p211 = por %p209, %p210
      %p213 = scmp.ne.s32.totalorder %s198, %s212
      %p214 = scmp.eq.s32.totalorder %s38, 0
      %p215 = por %p213, %p214
      %s217 = sadd.s32 %s216, 1
      %p220 = scmp.eq.s32.totalorder %s32, 1
      %p221 = scmp.ne.s32.totalorder %s216, %s218
      %p222 = scmp.eq.s32.totalorder %s32, 0
      %p223 = por %p221, %p222
      %p224 = scmp.ne.s32.totalorder %s216, %s218
      %p225 = scmp.eq.s32.totalorder %s37, 1
      %p226 = por %p224, %p225
      %p227 = scmp.ne.s32.totalorder %s218, %s219
      %p228 = scmp.eq.s32.totalorder %s37, 0
      %p229 = por %p227, %p228
      %p230 = scmp.ne.s32.totalorder %s218, %s219
      %p231 = scmp.eq.s32.totalorder %s38, 1
      %p232 = por %p230, %p231
      %p234 = scmp.ne.s32.totalorder %s219, %s233
      %p235 = scmp.eq.s32.totalorder %s38, 0
      %p236 = por %p234, %p235
      %s238 = sadd.s32 %s237, 1
      %p241 = scmp.eq.s32.totalorder %s32, 1
      %p242 = scmp.ne.s32.totalorder %s237, %s239
      %p243 = scmp.eq.s32.totalorder %s32, 0
      %p244 = por %p242, %p243
      %p245 = scmp.ne.s32.totalorder %s237, %s239
      %p246 = scmp.eq.s32.totalorder %s37, 1
      %p247 = por %p245, %p246
      %p248 = scmp.ne.s32.totalorder %s239, %s240
      %p249 = scmp.eq.s32.totalorder %s37, 0
      %p250 = por %p248, %p249
      %p251 = scmp.ne.s32.totalorder %s239, %s240
      %p252 = scmp.eq.s32.totalorder %s38, 1
      %p253 = por %p251, %p252
      %p255 = scmp.ne.s32.totalorder %s240, %s254
      %p256 = scmp.eq.s32.totalorder %s38, 0
      %p257 = por %p255, %p256
      %s259 = sadd.s32 %s258, 1
      %p262 = scmp.eq.s32.totalorder %s32, 1
      %p263 = scmp.ne.s32.totalorder %s258, %s260
      %p264 = scmp.eq.s32.totalorder %s32, 0
      %p265 = por %p263, %p264
      %p266 = scmp.ne.s32.totalorder %s258, %s260
      %p267 = scmp.eq.s32.totalorder %s37, 1
      %p268 = por %p266, %p267
      %p269 = scmp.ne.s32.totalorder %s260, %s261
      %p270 = scmp.eq.s32.totalorder %s37, 0
      %p271 = por %p269, %p270
      %p272 = scmp.ne.s32.totalorder %s260, %s261
      %p273 = scmp.eq.s32.totalorder %s38, 1
      %p274 = por %p272, %p273
      %p276 = scmp.ne.s32.totalorder %s261, %s275
      %p277 = scmp.eq.s32.totalorder %s38, 0
      %p278 = por %p276, %p277
      %s280 = sadd.s32 %s279, 1
      %p283 = scmp.eq.s32.totalorder %s32, 1
      %p284 = scmp.ne.s32.totalorder %s279, %s281
      %p285 = scmp.eq.s32.totalorder %s32, 0
      %p286 = por %p284, %p285
      %p287 = scmp.ne.s32.totalorder %s279, %s281
      %p288 = scmp.eq.s32.totalorder %s37, 1
      %p289 = por %p287, %p288
      %p290 = scmp.ne.s32.totalorder %s281, %s282
      %p291 = scmp.eq.s32.totalorder %s37, 0
      %p292 = por %p290, %p291
      %p293 = scmp.ne.s32.totalorder %s281, %s282
      %p294 = scmp.eq.s32.totalorder %s38, 1
      %p295 = por %p293, %p294
      %p297 = scmp.ne.s32.totalorder %s282, %s296
      %p298 = scmp.eq.s32.totalorder %s38, 0
      %p299 = por %p297, %p298
      %s301 = sadd.s32 %s300, 1
      %p304 = scmp.eq.s32.totalorder %s32, 1
      %p305 = scmp.ne.s32.totalorder %s300, %s302
      %p306 = scmp.eq.s32.totalorder %s32, 0
      %p307 = por %p305, %p306
      %p308 = scmp.ne.s32.totalorder %s300, %s302
      %p309 = scmp.eq.s32.totalorder %s37, 1
      %p310 = por %p308, %p309
      %p311 = scmp.ne.s32.totalorder %s302, %s303
      %p312 = scmp.eq.s32.totalorder %s37, 0
      %p313 = por %p311, %p312
      %p314 = scmp.ne.s32.totalorder %s302, %s303
      %p315 = scmp.eq.s32.totalorder %s38, 1
      %p316 = por %p314, %p315
      %p318 = scmp.ne.s32.totalorder %s303, %s317
      %p319 = scmp.eq.s32.totalorder %s38, 0
      %p320 = por %p318, %p319
      %s322 = sadd.s32 %s321, 1
      %p325 = scmp.eq.s32.totalorder %s32, 1
      %p326 = scmp.ne.s32.totalorder %s321, %s323
      %p327 = scmp.eq.s32.totalorder %s32, 0
      %p328 = por %p326, %p327
      %p329 = scmp.ne.s32.totalorder %s321, %s323
      %p330 = scmp.eq.s32.totalorder %s37, 1
      %p331 = por %p329, %p330
      %p332 = scmp.ne.s32.totalorder %s323, %s324
      %p333 = scmp.eq.s32.totalorder %s37, 0
      %p334 = por %p332, %p333
      %p335 = scmp.ne.s32.totalorder %s323, %s324
      %p336 = scmp.eq.s32.totalorder %s38, 1
      %p337 = por %p335, %p336
      %p339 = scmp.ne.s32.totalorder %s324, %s338
      %p340 = scmp.eq.s32.totalorder %s38, 0
      %p341 = por %p339, %p340
      %s343 = sadd.s32 %s342, 1
      %p346 = scmp.eq.s32.totalorder %s32, 1
      %p347 = scmp.ne.s32.totalorder %s342, %s344
      %p348 = scmp.eq.s32.totalorder %s32, 0
      %p349 = por %p347, %p348
      %p350 = scmp.ne.s32.totalorder %s342, %s344
      %p351 = scmp.eq.s32.totalorder %s37, 1
      %p352 = por %p350, %p351
      %p353 = scmp.ne.s32.totalorder %s344, %s345
      %p354 = scmp.eq.s32.totalorder %s37, 0
      %p355 = por %p353, %p354
      %p356 = scmp.ne.s32.totalorder %s344, %s345
      %p357 = scmp.eq.s32.totalorder %s38, 1
      %p358 = por %p356, %p357
      %p360 = scmp.ne.s32.totalorder %s345, %s359
      %p361 = scmp.eq.s32.totalorder %s38, 0
      %p362 = por %p360, %p361
      %s364 = sadd.s32 %s363, 1
      %p367 = scmp.eq.s32.totalorder %s32, 1
      %p368 = scmp.ne.s32.totalorder %s363, %s365
      %p369 = scmp.eq.s32.totalorder %s32, 0
      %p370 = por %p368, %p369
      %p371 = scmp.ne.s32.totalorder %s363, %s365
      %p372 = scmp.eq.s32.totalorder %s37, 1
      %p373 = por %p371, %p372
      %p374 = scmp.ne.s32.totalorder %s365, %s366
      %p375 = scmp.eq.s32.totalorder %s37, 0
      %p376 = por %p374, %p375
      %p377 = scmp.ne.s32.totalorder %s365, %s366
      %p378 = scmp.eq.s32.totalorder %s38, 1
      %p379 = por %p377, %p378
      %p381 = scmp.ne.s32.totalorder %s366, %s380
      %p382 = scmp.eq.s32.totalorder %s38, 0
      %p383 = por %p381, %p382
      %s385 = sadd.s32 %s384, 1
      %p388 = scmp.eq.s32.totalorder %s32, 1
      %p389 = scmp.ne.s32.totalorder %s384, %s386
      %p390 = scmp.eq.s32.totalorder %s32, 0
      %p391 = por %p389, %p390
      %p392 = scmp.ne.s32.totalorder %s384, %s386
      %p393 = scmp.eq.s32.totalorder %s37, 1
      %p394 = por %p392, %p393
      %p395 = scmp.ne.s32.totalorder %s386, %s387
      %p396 = scmp.eq.s32.totalorder %s37, 0
      %p397 = por %p395, %p396
      %p398 = scmp.ne.s32.totalorder %s386, %s387
      %p399 = scmp.eq.s32.totalorder %s38, 1
      %p400 = por %p398, %p399
      %p402 = scmp.ne.s32.totalorder %s387, %s401
      %p403 = scmp.eq.s32.totalorder %s38, 0
      %p404 = por %p402, %p403
      %s406 = sadd.s32 %s405, 1
      %p409 = scmp.eq.s32.totalorder %s32, 1
      %p410 = scmp.ne.s32.totalorder %s405, %s407
      %p411 = scmp.eq.s32.totalorder %s32, 0
      %p412 = por %p410, %p411
      %p413 = scmp.ne.s32.totalorder %s405, %s407
      %p414 = scmp.eq.s32.totalorder %s37, 1
      %p415 = por %p413, %p414
      %p416 = scmp.ne.s32.totalorder %s407, %s408
      %p417 = scmp.eq.s32.totalorder %s37, 0
      %p418 = por %p416, %p417
      %p419 = scmp.ne.s32.totalorder %s407, %s408
      %p420 = scmp.eq.s32.totalorder %s38, 1
      %p421 = por %p419, %p420
      %p423 = scmp.ne.s32.totalorder %s408, %s422
      %p424 = scmp.eq.s32.totalorder %s38, 0
      %p425 = por %p423, %p424
      %s426 = ssub.s32 %s39, %s51
      %s427 = ssub.s32 %s40, %s47
      %s428 = sor.u32 %s426, %s427
      %p429 = scmp.eq.s32.totalorder %s428, 0
      %s431 = sadd.s32 %s430, 1
      %s432 = scalar_select %p429, %s430, %s431
      %p435 = pneg %p429
      %p436 = scmp.eq.s32.totalorder %s32, 1
      %p437 = por %p435, %p436
      %p438 = scmp.ne.s32.totalorder %s430, %s433
      %p439 = scmp.eq.s32.totalorder %s32, 0
      %p440 = por %p438, %p439
      %p441 = scmp.ne.s32.totalorder %s430, %s433
      %p442 = scmp.eq.s32.totalorder %s37, 1
      %p443 = por %p441, %p442
      %p444 = scmp.ne.s32.totalorder %s433, %s434
      %p445 = scmp.eq.s32.totalorder %s37, 0
      %p446 = por %p444, %p445
      %p447 = scmp.ne.s32.totalorder %s433, %s434
      %p448 = scmp.eq.s32.totalorder %s38, 1
      %p449 = por %p447, %p448
      %p451 = scmp.ne.s32.totalorder %s434, %s450
      %p452 = scmp.eq.s32.totalorder %s38, 0
      %p453 = por %p451, %p452
      %p454 = scmp.le.s32.totalorder 1, %s32
      %p455 = scmp.lt.s32.totalorder %s32, 3
      %p456 = pnand %p454, %p455
      %p457 = pneg %p456
      // Predicated region
      $region9: #{tpu_custom_call.1} parent=5 // pred_check
        _
      $region10: #{tpu_custom_call.1} parent=5 // pred_check_branch
        %459 = sbr.rel (%p456) target = $region12
      $region11: #{tpu_custom_call.1} parent=5 // pred_region
        %s460 = ssub.s32 %s32, 1
        // Predicated region
        $region13: #{tpu_custom_call.1} parent=11 // pred_check
          %p461 = pneg %p145
        $region14: #{tpu_custom_call.1} parent=11 // pred_check_branch
          %463 = sbr.rel (%p461) target = $region16
        $region15: #{tpu_custom_call.1} parent=11 // pred_region
          _
        $region16: #{tpu_custom_call.1} parent=11 // pred_fallthru
          _
        // Predicated region
        $region17: #{tpu_custom_call.1} parent=11 // pred_check
          %p464 = pneg %p166
        $region18: #{tpu_custom_call.1} parent=11 // pred_check_branch
          %466 = sbr.rel (%p464) target = $region20
        $region19: #{tpu_custom_call.1} parent=11 // pred_region
          %s468 = ssub.s32 16, 16
          %469 = vsyncadd [#allocation9], %s468
          %s471 = sshll.u32 [#allocation8], 4
          %s472 = int_to_ptr.vmem [resolvable:$true] %s471
          %474 = dma.hbm_to_vmem [thread:$0]  %s4, 16, %s472, [#allocation9]
        $region20: #{tpu_custom_call.1} parent=11 // pred_fallthru
          _
        // Predicated region
        $region21: #{tpu_custom_call.1} parent=11 // pred_check
          %p475 = pneg %p187
        $region22: #{tpu_custom_call.1} parent=11 // pred_check_branch
          %477 = sbr.rel (%p475) target = $region24
        $region23: #{tpu_custom_call.1} parent=11 // pred_region
          _
        $region24: #{tpu_custom_call.1} parent=11 // pred_fallthru
          _
        // Predicated region
        $region25: #{tpu_custom_call.1} parent=11 // pred_check
          %p478 = pneg %p208
        $region26: #{tpu_custom_call.1} parent=11 // pred_check_branch
          %480 = sbr.rel (%p478) target = $region28
        $region27: #{tpu_custom_call.1} parent=11 // pred_region
          %s482 = ssub.s32 16, 16
          %483 = vsyncadd [#allocation9], %s482
          %s485 = sshll.u32 [#allocation10], 4
          %s486 = int_to_ptr.vmem [resolvable:$true] %s485
          %488 = dma.hbm_to_vmem [thread:$0]  %s6, 16, %s486, [#allocation9]
        $region28: #{tpu_custom_call.1} parent=11 // pred_fallthru
          _
        // Predicated region
        $region29: #{tpu_custom_call.1} parent=11 // pred_check
          %p489 = pneg %p229
        $region30: #{tpu_custom_call.1} parent=11 // pred_check_branch
          %491 = sbr.rel (%p489) target = $region32
        $region31: #{tpu_custom_call.1} parent=11 // pred_region
          %s493 = ssub.s32 256, 256
          %494 = vsyncadd [#allocation12], %s493
          %s495 = sshll.u32 [#allocation11], 4
          %s496 = int_to_ptr.vmem [resolvable:$true] %s495
          %501 = dma.hbm_to_vmem [thread:$0]  %s7, 256, %s496, [#allocation12], 64, 64, 4
        $region32: #{tpu_custom_call.1} parent=11 // pred_fallthru
          _
        // Predicated region
        $region33: #{tpu_custom_call.1} parent=11 // pred_check
          %p502 = pneg %p250
        $region34: #{tpu_custom_call.1} parent=11 // pred_check_branch
          %504 = sbr.rel (%p502) target = $region36
        $region35: #{tpu_custom_call.1} parent=11 // pred_region
          %s506 = ssub.s32 16, 16
          %507 = vsyncadd [#allocation12], %s506
          %s509 = sshll.u32 [#allocation13], 4
          %s510 = int_to_ptr.vmem [resolvable:$true] %s509
          %512 = dma.hbm_to_vmem [thread:$0]  %s8, 16, %s510, [#allocation12]
        $region36: #{tpu_custom_call.1} parent=11 // pred_fallthru
          _
        // Predicated region
        $region37: #{tpu_custom_call.1} parent=11 // pred_check
          %p513 = pneg %p271
        $region38: #{tpu_custom_call.1} parent=11 // pred_check_branch
          %515 = sbr.rel (%p513) target = $region40
        $region39: #{tpu_custom_call.1} parent=11 // pred_region
          %s517 = ssub.s32 16, 16
          %518 = vsyncadd [#allocation15], %s517
          %s520 = sshll.u32 [#allocation14], 4
          %s521 = int_to_ptr.vmem [resolvable:$true] %s520
          %523 = dma.hbm_to_vmem [thread:$0]  %s9, 16, %s521, [#allocation15]
        $region40: #{tpu_custom_call.1} parent=11 // pred_fallthru
          _
        // Predicated region
        $region41: #{tpu_custom_call.1} parent=11 // pred_check
          %p524 = pneg %p292
        $region42: #{tpu_custom_call.1} parent=11 // pred_check_branch
          %526 = sbr.rel (%p524) target = $region44
        $region43: #{tpu_custom_call.1} parent=11 // pred_region
          _
        $region44: #{tpu_custom_call.1} parent=11 // pred_fallthru
          _
        // Predicated region
        $region45: #{tpu_custom_call.1} parent=11 // pred_check
          %p527 = pneg %p313
        $region46: #{tpu_custom_call.1} parent=11 // pred_check_branch
          %529 = sbr.rel (%p527) target = $region48
        $region47: #{tpu_custom_call.1} parent=11 // pred_region
          _
        $region48: #{tpu_custom_call.1} parent=11 // pred_fallthru
          _
        // Predicated region
        $region49: #{tpu_custom_call.1} parent=11 // pred_check
          %p530 = pneg %p334
        $region50: #{tpu_custom_call.1} parent=11 // pred_check_branch
          %532 = sbr.rel (%p530) target = $region52
        $region51: #{tpu_custom_call.1} parent=11 // pred_region
          _
        $region52: #{tpu_custom_call.1} parent=11 // pred_fallthru
          _
        // Predicated region
        $region53: #{tpu_custom_call.1} parent=11 // pred_check
          %p533 = pneg %p355
        $region54: #{tpu_custom_call.1} parent=11 // pred_check_branch
          %535 = sbr.rel (%p533) target = $region56
        $region55: #{tpu_custom_call.1} parent=11 // pred_region
          _
        $region56: #{tpu_custom_call.1} parent=11 // pred_fallthru
          _
        // Predicated region
        $region57: #{tpu_custom_call.1} parent=11 // pred_check
          %p536 = pneg %p376
        $region58: #{tpu_custom_call.1} parent=11 // pred_check_branch
          %538 = sbr.rel (%p536) target = $region60
        $region59: #{tpu_custom_call.1} parent=11 // pred_region
          _
        $region60: #{tpu_custom_call.1} parent=11 // pred_fallthru
          _
        // Predicated region
        $region61: #{tpu_custom_call.1} parent=11 // pred_check
          %p539 = pneg %p397
        $region62: #{tpu_custom_call.1} parent=11 // pred_check_branch
          %541 = sbr.rel (%p539) target = $region64
        $region63: #{tpu_custom_call.1} parent=11 // pred_region
          _
        $region64: #{tpu_custom_call.1} parent=11 // pred_fallthru
          _
        // Predicated region
        $region65: #{tpu_custom_call.1} parent=11 // pred_check
          %p542 = pneg %p418
        $region66: #{tpu_custom_call.1} parent=11 // pred_check_branch
          %544 = sbr.rel (%p542) target = $region68
        $region67: #{tpu_custom_call.1} parent=11 // pred_region
          _
        $region68: #{tpu_custom_call.1} parent=11 // pred_fallthru
          _
      $region12: #{tpu_custom_call.1} parent=5 // pred_fallthru
        _
      %p545 = scmp.lt.s32.totalorder %s32, 2
      // Predicated region
      $region69: #{tpu_custom_call.1} parent=5 // pred_check
        %p546 = pneg %p545
      $region70: #{tpu_custom_call.1} parent=5 // pred_check_branch
        %548 = sbr.rel (%p546) target = $region72
      $region71: #{tpu_custom_call.1} parent=5 // pred_region
        // Predicated region
        $region73: #{tpu_custom_call.1} parent=71 // pred_check
          %p549 = pneg %p66
        $region74: #{tpu_custom_call.1} parent=71 // pred_check_branch
          %551 = sbr.rel (%p549) target = $region76
        $region75: #{tpu_custom_call.1} parent=71 // pred_region
          %p552 = scmp.lt.s32.totalorder %s39, 1
          %s553 = scalar_select %p552, %s39, 1
          %p554 = scmp.lt.s32.totalorder %s40, 0
          %s555 = scalar_select %p554, %s40, 0
          %s556 = sadd.s32 %s555, %s553
          %s557 = smul.addr %s556, 8
          %s558 = scalar_lea.vmem %s0, %s557
        $region76: #{tpu_custom_call.1} parent=71 // pred_fallthru
          _
        // Predicated region
        $region77: #{tpu_custom_call.1} parent=71 // pred_check
          %p559 = pneg %p92
        $region78: #{tpu_custom_call.1} parent=71 // pred_check_branch
          %561 = sbr.rel (%p559) target = $region80
        $region79: #{tpu_custom_call.1} parent=71 // pred_region
          %s562 = sand.u32 %s82, 1
          %s563 = scalar_lea.sflag [#allocation6], %s562
          %s564 = sand.u32 %s82, 1
          %s565 = smul.addr %s564, 4
          %s566 = scalar_lea.vmem [#allocation5], %s565
          %s568 = ssub.s32 64, 64
          %569 = vsyncadd %s563, %s568
          %s570 = smul.addr %s39, 64
          %s571 = scalar_lea.hbm %s1, %s570
          %s573 = sshll.u32 %s566, 4
          %s574 = int_to_ptr.vmem [resolvable:$true] %s573
          %576 = dma.hbm_to_vmem [thread:$0]  %s571, 64, %s574, %s563
        $region80: #{tpu_custom_call.1} parent=71 // pred_fallthru
          _
        // Predicated region
        $region81: #{tpu_custom_call.1} parent=71 // pred_check
          %p577 = pneg %p118
        $region82: #{tpu_custom_call.1} parent=71 // pred_check_branch
          %579 = sbr.rel (%p577) target = $region84
        $region83: #{tpu_custom_call.1} parent=71 // pred_region
          %p580 = scmp.lt.s32.totalorder %s39, 1
          %s581 = scalar_select %p580, %s39, 1
          %s582 = scalar_lea.vmem %s2, %s581
        $region84: #{tpu_custom_call.1} parent=71 // pred_fallthru
          _
      $region72: #{tpu_custom_call.1} parent=5 // pred_fallthru
        _
      %p583 = scmp.le.s32.totalorder 1, %s32
      %p584 = scmp.lt.s32.totalorder %s32, 3
      %p585 = pnand %p583, %p584
      %p586 = pneg %p585
      // Predicated region
      $region85: #{tpu_custom_call.1} parent=5 // pred_check
        _
      $region86: #{tpu_custom_call.1} parent=5 // pred_check_branch
        %588 = sbr.rel (%p585) target = $region88
      $region87: #{tpu_custom_call.1} parent=5 // pred_region
        %s589 = ssub.s32 %s32, 1
        %s590 = sand.u32 %s85, 1
        %s591 = scalar_lea.sflag [#allocation6], %s590
        %s592 = sand.u32 %s85, 1
        %s593 = smul.addr %s592, 4
        %s594 = scalar_lea.vmem [#allocation5], %s593
        // Predicated region
        $region89: #{tpu_custom_call.1} parent=87 // pred_check
          %p595 = pneg %p98
        $region90: #{tpu_custom_call.1} parent=87 // pred_check_branch
          %597 = sbr.rel (%p595) target = $region92
        $region91: #{tpu_custom_call.1} parent=87 // pred_region
          %598 = dma.done %s591, 64
        $region92: #{tpu_custom_call.1} parent=87 // pred_fallthru
          _
        // Predicated region
        $region93: #{tpu_custom_call.1} parent=87 // pred_check
          %p599 = pneg %p166
        $region94: #{tpu_custom_call.1} parent=87 // pred_check_branch
          %601 = sbr.rel (%p599) target = $region96
        $region95: #{tpu_custom_call.1} parent=87 // pred_region
          %602 = dma.done [#allocation9], 16
        $region96: #{tpu_custom_call.1} parent=87 // pred_fallthru
          _
        // Predicated region
        $region97: #{tpu_custom_call.1} parent=87 // pred_check
          %p603 = pneg %p208
        $region98: #{tpu_custom_call.1} parent=87 // pred_check_branch
          %605 = sbr.rel (%p603) target = $region100
        $region99: #{tpu_custom_call.1} parent=87 // pred_region
          %606 = dma.done [#allocation9], 16
        $region100: #{tpu_custom_call.1} parent=87 // pred_fallthru
          _
        // Predicated region
        $region101: #{tpu_custom_call.1} parent=87 // pred_check
          %p607 = pneg %p229
        $region102: #{tpu_custom_call.1} parent=87 // pred_check_branch
          %609 = sbr.rel (%p607) target = $region104
        $region103: #{tpu_custom_call.1} parent=87 // pred_region
          %610 = dma.done [#allocation12], 256
        $region104: #{tpu_custom_call.1} parent=87 // pred_fallthru
          _
        // Predicated region
        $region105: #{tpu_custom_call.1} parent=87 // pred_check
          %p611 = pneg %p250
        $region106: #{tpu_custom_call.1} parent=87 // pred_check_branch
          %613 = sbr.rel (%p611) target = $region108
        $region107: #{tpu_custom_call.1} parent=87 // pred_region
          %614 = dma.done [#allocation12], 16
        $region108: #{tpu_custom_call.1} parent=87 // pred_fallthru
          _
        // Predicated region
        $region109: #{tpu_custom_call.1} parent=87 // pred_check
          %p615 = pneg %p271
        $region110: #{tpu_custom_call.1} parent=87 // pred_check_branch
          %617 = sbr.rel (%p615) target = $region112
        $region111: #{tpu_custom_call.1} parent=87 // pred_region
          %618 = dma.done [#allocation15], 16
        $region112: #{tpu_custom_call.1} parent=87 // pred_fallthru
          _
        %p619 = scmp.lt.s32.totalorder %s41, 1
        %s620 = scalar_select %p619, %s41, 1
        %p621 = scmp.lt.s32.totalorder %s42, 0
        %s622 = scalar_select %p621, %s42, 0
        %s623 = sadd.s32 %s622, %s620
        %s624 = smul.addr %s623, 8
        %s625 = scalar_lea.vmem %s0, %s624
        %p626 = pneg %p72
        %p627 = pneg %p69
        %s628 = sand.u32 %s85, 1
        %s629 = scalar_lea.sflag [#allocation6], %s628
        %s630 = sand.u32 %s85, 1
        %s631 = smul.addr %s630, 4
        %s632 = scalar_lea.vmem [#allocation5], %s631
        %p633 = pneg %p98
        %p634 = pneg %p95
        %p635 = scmp.lt.s32.totalorder %s41, 1
        %s636 = scalar_select %p635, %s41, 1
        %s637 = scalar_lea.vmem %s2, %s636
        %p638 = pneg %p124
        %p639 = pneg %p121
        %p640 = pneg %p145
        %p641 = pneg %p142
        %p642 = pneg %p166
        %p643 = pneg %p163
        %p644 = pneg %p187
        %p645 = pneg %p184
        %p646 = pneg %p208
        %p647 = pneg %p205
        %p648 = pneg %p229
        %p649 = pneg %p226
        %p650 = pneg %p250
        %p651 = pneg %p247
        %p652 = pneg %p271
        %p653 = pneg %p268
        %p654 = pneg %p292
        %p655 = pneg %p289
        %p656 = pneg %p313
        %p657 = pneg %p310
        %p658 = pneg %p334
        %p659 = pneg %p331
        %p660 = pneg %p355
        %p661 = pneg %p352
        %p662 = pneg %p376
        %p663 = pneg %p373
        %p664 = pneg %p397
        %p665 = pneg %p394
        %p666 = pneg %p418
        %p667 = pneg %p415
        %p668 = pneg %p446
        %p669 = pneg %p443
        %s670 = sand.u32 %s433, 1
        %s671 = scalar_lea.sflag [#allocation7], %s670
        %s672 = sand.u32 %s433, 1
        %s673 = smul.addr %s672, 8
        %s674 = scalar_lea.vmem [#allocation16], %s673
        %p675 = scmp.lt.s32.totalorder %s41, 1
        %s676 = scalar_select %p675, %s41, 1
        %p677 = scmp.lt.s32.totalorder %s42, 0
        %s678 = scalar_select %p677, %s42, 0
        %s679 = sadd.s32 %s678, %s676
        %s680 = smul.addr %s679, 8
        %s681 = scalar_lea.vmem %s0, %s680
        %p682 = scmp.lt.s32.totalorder %s41, 1
        %s683 = scalar_select %p682, %s41, 1
        %s684 = scalar_lea.vmem %s2, %s683
        %v686 = vld [vmem:[%s681] sm:$0xff]
        %p687 = scmp.eq.s32.totalorder %s42, 0
        // Predicated region
        $region113: #{tpu_custom_call.1} parent=87 // pred_check
          %p688 = pneg %p687
        $region114: #{tpu_custom_call.1} parent=87 // pred_check_branch
          %690 = sbr.rel (%p688) target = $region116
        $region115: #{tpu_custom_call.1} parent=87 // pred_region
          %v691 = vld [vmem:[%s594] sm:$0xf]
          %v692 = vld [vmem:[%s5] sm:$0xf]
          %v693 = vld [vmem:[%s5 + $0x4] sm:$0xf]
          %v694 = vld [vmem:[%s5 + $0x8] sm:$0xf]
          %v695 = vld [vmem:[%s5 + $0xc] sm:$0xf]
          %v696 = vld [vmem:[#allocation10] sm:$0x1]
          %v698 = vlaneseq
          %v699 = vshrl.u32 %v698, 7
          %v700 = vsub.s32 0, %v699
          %v701 = vrot.slane %v696, %v700
          %v707 = vunpack.c.l.b16 %v692
          %v708 = vunpack.c.l.b16 %v693
          %v709 = vunpack.c.l.b16 %v694
          %v710 = vunpack.c.l.b16 %v695
          %v711 = vpack.c.b16 %v708, %v707
          %v712 = vpack.c.b16 %v710, %v709
          %vm715 = vcmask 261120
          %v717 = vsel %vm715, %v691, 0
          %719 = vmatprep.subr.bf16.mxu0 0
          %720 = vmatpush1.bf16.msra.mxu0 %v711
          %721 = vmatprep.subr.bf16.mxu0 0
          %722 = vmatpush1.bf16.msra.mxu0 %v712
          %723 = vmatprep.subr.bf16.mxu0 0
          %724 = vmatpush1.bf16.msra.mxu0 0
          %725 = vmatprep.subr.bf16.mxu0 0
          %726 = vmatpush1.bf16.msra.mxu0 0
          %727 = vmatprep.subr.bf16.mxu0 0
          %728 = vmatpush1.bf16.msra.mxu0 0
          %729 = vmatprep.subr.bf16.mxu0 0
          %730 = vmatpush1.bf16.msra.mxu0 0
          %731 = vmatprep.subr.bf16.mxu0 0
          %732 = vmatpush1.bf16.msra.mxu0 0
          %733 = vmatprep.subr.bf16.mxu0 0
          %734 = vmatpush1.bf16.msra.mxu0 0
          %735 = vmatprep.subr.bf16.mxu0 0
          %736 = vmatpush1.bf16.msra.mxu0 0
          %737 = vmatprep.subr.bf16.mxu0 0
          %738 = vmatpush1.bf16.msra.mxu0 0
          %739 = vmatprep.subr.bf16.mxu0 0
          %740 = vmatpush1.bf16.msra.mxu0 0
          %741 = vmatprep.subr.bf16.mxu0 0
          %742 = vmatpush1.bf16.msra.mxu0 0
          %743 = vmatprep.subr.bf16.mxu0 0
          %744 = vmatpush1.bf16.msra.mxu0 0
          %745 = vmatprep.subr.bf16.mxu0 0
          %746 = vmatpush1.bf16.msra.mxu0 0
          %747 = vmatprep.subr.bf16.mxu0 0
          %748 = vmatpush1.bf16.msra.mxu0 0
          %749 = vmatprep.subr.bf16.mxu0 0
          %750 = vmatpush1.bf16.msra.mxu0 0
          %751 = vmatprep.mubr.bf16.mxu0 0
          %752 = vmatmul.mubr.bf16.gmra.mrb[0].mxu0 %v717
          %v753 = vpop.f32.mrb[0].mxu0
          %v754 = vadd.f32 %v701, %v753
          %v755 = vpop.f32.mrb[0].mxu0
          %v756 = vpop.f32.mrb[0].mxu0
          %v757 = vpop.f32.mrb[0].mxu0
          %758 = vdwg.mxu0
          %v759 = vpack.c.bf16 %v754, %v754
          %vm760 = vcmask 257024
          %761 = vst.msk [vmem:[#allocation2] sm:$0xf] %vm760, %v759
          %v763 = vunpack.c.l.b16 %v759
          %v764 = vpack.c.b16 %v763, %v763
          %765 = vrot.lane.b32.xlu0 %v764, 96
          %v766 = vpop.permute.xlu0 %765
          %768 = vst.msk [vmem:[#allocation3] sm:$0xf] %vm760, %v766
        $region116: #{tpu_custom_call.1} parent=87 // pred_fallthru
          _
        %v769 = vpack.c.bf16 %v686, %v686
        %v770 = vld [vmem:[%s3] sm:$0xf]
        %v771 = vld [vmem:[%s3 + $0x4] sm:$0xf]
        %v772 = vld [vmem:[%s3 + $0x8] sm:$0xf]
        %v773 = vld [vmem:[%s3 + $0xc] sm:$0xf]
        %v774 = vld [vmem:[#allocation8] sm:$0x1]
        %v776 = vlaneseq
        %v777 = vshrl.u32 %v776, 7
        %v778 = vsub.s32 0, %v777
        %v779 = vrot.slane %v774, %v778
        %v785 = vunpack.c.l.b16 %v770
        %v786 = vunpack.c.l.b16 %v771
        %v787 = vunpack.c.l.b16 %v772
        %v788 = vunpack.c.l.b16 %v773
        %v789 = vpack.c.b16 %v786, %v785
        %v790 = vpack.c.b16 %v788, %v787
        %vm793 = vcmask 261120
        %v795 = vsel %vm793, %v769, 0
        %797 = vmatprep.subr.bf16.mxu0 0
        %798 = vmatpush1.bf16.msra.mxu0 %v789
        %799 = vmatprep.subr.bf16.mxu0 0
        %800 = vmatpush1.bf16.msra.mxu0 %v790
        %801 = vmatprep.subr.bf16.mxu0 0
        %802 = vmatpush1.bf16.msra.mxu0 0
        %803 = vmatprep.subr.bf16.mxu0 0
        %804 = vmatpush1.bf16.msra.mxu0 0
        %805 = vmatprep.subr.bf16.mxu0 0
        %806 = vmatpush1.bf16.msra.mxu0 0
        %807 = vmatprep.subr.bf16.mxu0 0
        %808 = vmatpush1.bf16.msra.mxu0 0
        %809 = vmatprep.subr.bf16.mxu0 0
        %810 = vmatpush1.bf16.msra.mxu0 0
        %811 = vmatprep.subr.bf16.mxu0 0
        %812 = vmatpush1.bf16.msra.mxu0 0
        %813 = vmatprep.subr.bf16.mxu0 0
        %814 = vmatpush1.bf16.msra.mxu0 0
        %815 = vmatprep.subr.bf16.mxu0 0
        %816 = vmatpush1.bf16.msra.mxu0 0
        %817 = vmatprep.subr.bf16.mxu0 0
        %818 = vmatpush1.bf16.msra.mxu0 0
        %819 = vmatprep.subr.bf16.mxu0 0
        %820 = vmatpush1.bf16.msra.mxu0 0
        %821 = vmatprep.subr.bf16.mxu0 0
        %822 = vmatpush1.bf16.msra.mxu0 0
        %823 = vmatprep.subr.bf16.mxu0 0
        %824 = vmatpush1.bf16.msra.mxu0 0
        %825 = vmatprep.subr.bf16.mxu0 0
        %826 = vmatpush1.bf16.msra.mxu0 0
        %827 = vmatprep.subr.bf16.mxu0 0
        %828 = vmatpush1.bf16.msra.mxu0 0
        %829 = vmatprep.mubr.bf16.mxu0 0
        %830 = vmatmul.mubr.bf16.gmra.mrb[0].mxu0 %v795
        %v831 = vpop.f32.mrb[0].mxu0
        %v832 = vadd.f32 %v779, %v831
        %v833 = vpop.f32.mrb[0].mxu0
        %v834 = vpop.f32.mrb[0].mxu0
        %v835 = vpop.f32.mrb[0].mxu0
        %836 = vdwg.mxu0
        %v837 = vpack.c.bf16 %v832, %v832
        %v838 = vld [vmem:[#allocation2] sm:$0xf]
        %v839 = vld [vmem:[#allocation3] sm:$0xf]
        %v840 = vld [vmem:[%s684] sm:$0x1]
        %v842 = vlaneseq
        %v843 = vshrl.u32 %v842, 7
        %v844 = vsub.s32 0, %v843
        %v845 = vrot.slane %v840, %v844
        %vm847 = vcmask 64512
        %v849 = vsel %vm847, %v837, 0
        %v852 = vsel %vm847, %v838, 0
        %854 = vmatprep.subr.bf16.mxu0 0
        %855 = vmatpush1.bf16.xpose.msra.mxu0 %v852
        %856 = vmatprep.subr.bf16.mxu0 0
        %857 = vmatpush1.bf16.xpose.msra.mxu0 0
        %858 = vmatprep.subr.bf16.mxu0 0
        %859 = vmatpush1.bf16.xpose.msra.mxu0 0
        %860 = vmatprep.subr.bf16.mxu0 0
        %861 = vmatpush1.bf16.xpose.msra.mxu0 0
        %862 = vmatprep.subr.bf16.mxu0 0
        %863 = vmatpush1.bf16.xpose.msra.mxu0 0
        %864 = vmatprep.subr.bf16.mxu0 0
        %865 = vmatpush1.bf16.xpose.msra.mxu0 0
        %866 = vmatprep.subr.bf16.mxu0 0
        %867 = vmatpush1.bf16.xpose.msra.mxu0 0
        %868 = vmatprep.subr.bf16.mxu0 0
        %869 = vmatpush1.bf16.xpose.msra.mxu0 0
        %870 = vmatprep.subr.bf16.mxu0 0
        %871 = vmatpush1.bf16.xpose.msra.mxu0 0
        %872 = vmatprep.subr.bf16.mxu0 0
        %873 = vmatpush1.bf16.xpose.msra.mxu0 0
        %874 = vmatprep.subr.bf16.mxu0 0
        %875 = vmatpush1.bf16.xpose.msra.mxu0 0
        %876 = vmatprep.subr.bf16.mxu0 0
        %877 = vmatpush1.bf16.xpose.msra.mxu0 0
        %878 = vmatprep.subr.bf16.mxu0 0
        %879 = vmatpush1.bf16.xpose.msra.mxu0 0
        %880 = vmatprep.subr.bf16.mxu0 0
        %881 = vmatpush1.bf16.xpose.msra.mxu0 0
        %882 = vmatprep.subr.bf16.mxu0 0
        %883 = vmatpush1.bf16.xpose.msra.mxu0 0
        %884 = vmatprep.subr.bf16.mxu0 0
        %885 = vmatpush1.bf16.xpose.msra.mxu0 0
        %886 = vmatprep.mubr.bf16.mxu0 0
        %887 = vmatmul.mubr.bf16.gmra.mrb[0].mxu0 %v849
        %v888 = vpop.f32.mrb[0].mxu0
        %v889 = vadd.f32 %v845, %v888
        %v890 = vpop.f32.mrb[0].mxu0
        %v891 = vpop.f32.mrb[0].mxu0
        %v892 = vpop.f32.mrb[0].mxu0
        %893 = vdwg.mxu0
        %v894 = vsel %vm847, %v889, -inf
        %895 = vmax.xlane.f32.xlu0 %v894
        %v896 = vpop.xlane.xlu0 %895
        %v897 = vsub.f32 %v889, %v896
        %v898 = vmul.f32 %v897, 1.442695
        %v899 = vpow.pop %v898
        %v900 = vsel %vm847, %v899, 0.0
        %901 = vadd.xlane.f32.xlu0 %v900
        %v902 = vpop.xlane.xlu0 %901
        %v903 = vpack.c.bf16 %v899, %v899
        %v905 = vsel %vm847, %v903, 0
        %vm907 = vcmask 1043456
        %v909 = vsel %vm907, %v839, 0
        %911 = vmatprep.subr.bf16.mxu0 0
        %912 = vmatpush1.bf16.msra.mxu0 %v909
        %913 = vmatprep.subr.bf16.mxu0 0
        %914 = vmatpush1.bf16.msra.mxu0 0
        %915 = vmatprep.subr.bf16.mxu0 0
        %916 = vmatpush1.bf16.msra.mxu0 0
        %917 = vmatprep.subr.bf16.mxu0 0
        %918 = vmatpush1.bf16.msra.mxu0 0
        %919 = vmatprep.subr.bf16.mxu0 0
        %920 = vmatpush1.bf16.msra.mxu0 0
        %921 = vmatprep.subr.bf16.mxu0 0
        %922 = vmatpush1.bf16.msra.mxu0 0
        %923 = vmatprep.subr.bf16.mxu0 0
        %924 = vmatpush1.bf16.msra.mxu0 0
        %925 = vmatprep.subr.bf16.mxu0 0
        %926 = vmatpush1.bf16.msra.mxu0 0
        %927 = vmatprep.subr.bf16.mxu0 0
        %928 = vmatpush1.bf16.msra.mxu0 0
        %929 = vmatprep.subr.bf16.mxu0 0
        %930 = vmatpush1.bf16.msra.mxu0 0
        %931 = vmatprep.subr.bf16.mxu0 0
        %932 = vmatpush1.bf16.msra.mxu0 0
        %933 = vmatprep.subr.bf16.mxu0 0
        %934 = vmatpush1.bf16.msra.mxu0 0
        %935 = vmatprep.subr.bf16.mxu0 0
        %936 = vmatpush1.bf16.msra.mxu0 0
        %937 = vmatprep.subr.bf16.mxu0 0
        %938 = vmatpush1.bf16.msra.mxu0 0
        %939 = vmatprep.subr.bf16.mxu0 0
        %940 = vmatpush1.bf16.msra.mxu0 0
        %941 = vmatprep.subr.bf16.mxu0 0
        %942 = vmatpush1.bf16.msra.mxu0 0
        %943 = vmatprep.mubr.bf16.mxu0 0
        %944 = vmatmul.mubr.bf16.gmra.mrb[0].mxu0 %v905
        %v945 = vpop.f32.mrb[0].mxu0
        %v946 = vadd.f32 0.0, %v945
        %v947 = vpop.f32.mrb[0].mxu0
        %v948 = vpop.f32.mrb[0].mxu0
        %v949 = vpop.f32.mrb[0].mxu0
        %950 = vdwg.mxu0
        %v951 = vrcp.pop %v902
        %v952 = vmul.f32 %v946, %v951
        %953 = vst.msk [vmem:[#allocation4] sm:$0xff] %vm847, %v952
        %955 = vrot.lane.b32.xlu0 %v837, 120
        %v956 = vpop.permute.xlu0 %955
        %v958 = vunpack.c.l.b16 %v838
        %v959 = vpack.c.b16 %v958, %v958
        %960 = vrot.lane.b32.xlu0 %v959, 120
        %v961 = vpop.permute.xlu0 %960
        %v963 = vsel %vm847, %v956, 0
        %v966 = vsel %vm847, %v961, 0
        %968 = vmatprep.subr.bf16.mxu0 0
        %969 = vmatpush1.bf16.xpose.msra.mxu0 %v966
        %970 = vmatprep.subr.bf16.mxu0 0
        %971 = vmatpush1.bf16.xpose.msra.mxu0 0
        %972 = vmatprep.subr.bf16.mxu0 0
        %973 = vmatpush1.bf16.xpose.msra.mxu0 0
        %974 = vmatprep.subr.bf16.mxu0 0
        %975 = vmatpush1.bf16.xpose.msra.mxu0 0
        %976 = vmatprep.subr.bf16.mxu0 0
        %977 = vmatpush1.bf16.xpose.msra.mxu0 0
        %978 = vmatprep.subr.bf16.mxu0 0
        %979 = vmatpush1.bf16.xpose.msra.mxu0 0
        %980 = vmatprep.subr.bf16.mxu0 0
        %981 = vmatpush1.bf16.xpose.msra.mxu0 0
        %982 = vmatprep.subr.bf16.mxu0 0
        %983 = vmatpush1.bf16.xpose.msra.mxu0 0
        %984 = vmatprep.subr.bf16.mxu0 0
        %985 = vmatpush1.bf16.xpose.msra.mxu0 0
        %986 = vmatprep.subr.bf16.mxu0 0
        %987 = vmatpush1.bf16.xpose.msra.mxu0 0
        %988 = vmatprep.subr.bf16.mxu0 0
        %989 = vmatpush1.bf16.xpose.msra.mxu0 0
        %990 = vmatprep.subr.bf16.mxu0 0
        %991 = vmatpush1.bf16.xpose.msra.mxu0 0
        %992 = vmatprep.subr.bf16.mxu0 0
        %993 = vmatpush1.bf16.xpose.msra.mxu0 0
        %994 = vmatprep.subr.bf16.mxu0 0
        %995 = vmatpush1.bf16.xpose.msra.mxu0 0
        %996 = vmatprep.subr.bf16.mxu0 0
        %997 = vmatpush1.bf16.xpose.msra.mxu0 0
        %998 = vmatprep.subr.bf16.mxu0 0
        %999 = vmatpush1.bf16.xpose.msra.mxu0 0
        %1000 = vmatprep.mubr.bf16.mxu0 0
        %1001 = vmatmul.mubr.bf16.gmra.mrb[0].mxu0 %v963
        %v1002 = vpop.f32.mrb[0].mxu0
        %v1003 = vadd.f32 %v845, %v1002
        %v1004 = vpop.f32.mrb[0].mxu0
        %v1005 = vpop.f32.mrb[0].mxu0
        %v1006 = vpop.f32.mrb[0].mxu0
        %1007 = vdwg.mxu0
        %v1008 = vsel %vm847, %v1003, -inf
        %1009 = vmax.xlane.f32.xlu0 %v1008
        %v1010 = vpop.xlane.xlu0 %1009
        %v1011 = vsub.f32 %v1003, %v1010
        %v1012 = vmul.f32 %v1011, 1.442695
        %v1013 = vpow.pop %v1012
        %v1014 = vsel %vm847, %v1013, 0.0
        %1015 = vadd.xlane.f32.xlu0 %v1014
        %v1016 = vpop.xlane.xlu0 %1015
        %v1017 = vpack.c.bf16 %v1013, %v1013
        %v1019 = vunpack.c.l.b16 %v839
        %v1020 = vpack.c.b16 %v1019, %v1019
        %1021 = vrot.lane.b32.xlu0 %v1020, 120
        %v1022 = vpop.permute.xlu0 %1021
        %v1024 = vsel %vm847, %v1017, 0
        %v1027 = vsel %vm907, %v1022, 0
        %1029 = vmatprep.subr.bf16.mxu0 0
        %1030 = vmatpush1.bf16.msra.mxu0 %v1027
        %1031 = vmatprep.subr.bf16.mxu0 0
        %1032 = vmatpush1.bf16.msra.mxu0 0
        %1033 = vmatprep.subr.bf16.mxu0 0
        %1034 = vmatpush1.bf16.msra.mxu0 0
        %1035 = vmatprep.subr.bf16.mxu0 0
        %1036 = vmatpush1.bf16.msra.mxu0 0
        %1037 = vmatprep.subr.bf16.mxu0 0
        %1038 = vmatpush1.bf16.msra.mxu0 0
        %1039 = vmatprep.subr.bf16.mxu0 0
        %1040 = vmatpush1.bf16.msra.mxu0 0
        %1041 = vmatprep.subr.bf16.mxu0 0
        %1042 = vmatpush1.bf16.msra.mxu0 0
        %1043 = vmatprep.subr.bf16.mxu0 0
        %1044 = vmatpush1.bf16.msra.mxu0 0
        %1045 = vmatprep.subr.bf16.mxu0 0
        %1046 = vmatpush1.bf16.msra.mxu0 0
        %1047 = vmatprep.subr.bf16.mxu0 0
        %1048 = vmatpush1.bf16.msra.mxu0 0
        %1049 = vmatprep.subr.bf16.mxu0 0
        %1050 = vmatpush1.bf16.msra.mxu0 0
        %1051 = vmatprep.subr.bf16.mxu0 0
        %1052 = vmatpush1.bf16.msra.mxu0 0
        %1053 = vmatprep.subr.bf16.mxu0 0
        %1054 = vmatpush1.bf16.msra.mxu0 0
        %1055 = vmatprep.subr.bf16.mxu0 0
        %1056 = vmatpush1.bf16.msra.mxu0 0
        %1057 = vmatprep.subr.bf16.mxu0 0
        %1058 = vmatpush1.bf16.msra.mxu0 0
        %1059 = vmatprep.subr.bf16.mxu0 0
        %1060 = vmatpush1.bf16.msra.mxu0 0
        %1061 = vmatprep.mubr.bf16.mxu0 0
        %1062 = vmatmul.mubr.bf16.gmra.mrb[0].mxu0 %v1024
        %v1063 = vpop.f32.mrb[0].mxu0
        %v1064 = vadd.f32 0.0, %v1063
        %v1065 = vpop.f32.mrb[0].mxu0
        %v1066 = vpop.f32.mrb[0].mxu0
        %v1067 = vpop.f32.mrb[0].mxu0
        %1068 = vdwg.mxu0
        %v1069 = vrcp.pop %v1016
        %v1070 = vmul.f32 %v1064, %v1069
        %1072 = vrot.lane.b32.xlu0 %v1070, 8
        %v1073 = vpop.permute.xlu0 %1072
        %vm1075 = vcmask 130112
        %1076 = vst.msk [vmem:[#allocation4] sm:$0xff] %vm1075, %v1073
        %1077 = vrot.lane.b32.xlu0 %v837, 112
        %v1078 = vpop.permute.xlu0 %1077
        %1079 = vrot.lane.b32.xlu0 %v959, 112
        %v1080 = vpop.permute.xlu0 %1079
        %v1082 = vsel %vm847, %v1078, 0
        %v1085 = vsel %vm847, %v1080, 0
        %1087 = vmatprep.subr.bf16.mxu0 0
        %1088 = vmatpush1.bf16.xpose.msra.mxu0 %v1085
        %1089 = vmatprep.subr.bf16.mxu0 0
        %1090 = vmatpush1.bf16.xpose.msra.mxu0 0
        %1091 = vmatprep.subr.bf16.mxu0 0
        %1092 = vmatpush1.bf16.xpose.msra.mxu0 0
        %1093 = vmatprep.subr.bf16.mxu0 0
        %1094 = vmatpush1.bf16.xpose.msra.mxu0 0
        %1095 = vmatprep.subr.bf16.mxu0 0
        %1096 = vmatpush1.bf16.xpose.msra.mxu0 0
        %1097 = vmatprep.subr.bf16.mxu0 0
        %1098 = vmatpush1.bf16.xpose.msra.mxu0 0
        %1099 = vmatprep.subr.bf16.mxu0 0
        %1100 = vmatpush1.bf16.xpose.msra.mxu0 0
        %1101 = vmatprep.subr.bf16.mxu0 0
        %1102 = vmatpush1.bf16.xpose.msra.mxu0 0
        %1103 = vmatprep.subr.bf16.mxu0 0
        %1104 = vmatpush1.bf16.xpose.msra.mxu0 0
        %1105 = vmatprep.subr.bf16.mxu0 0
        %1106 = vmatpush1.bf16.xpose.msra.mxu0 0
        %1107 = vmatprep.subr.bf16.mxu0 0
        %1108 = vmatpush1.bf16.xpose.msra.mxu0 0
        %1109 = vmatprep.subr.bf16.mxu0 0
        %1110 = vmatpush1.bf16.xpose.msra.mxu0 0
        %1111 = vmatprep.subr.bf16.mxu0 0
        %1112 = vmatpush1.bf16.xpose.msra.mxu0 0
        %1113 = vmatprep.subr.bf16.mxu0 0
        %1114 = vmatpush1.bf16.xpose.msra.mxu0 0
        %1115 = vmatprep.subr.bf16.mxu0 0
        %1116 = vmatpush1.bf16.xpose.msra.mxu0 0
        %1117 = vmatprep.subr.bf16.mxu0 0
        %1118 = vmatpush1.bf16.xpose.msra.mxu0 0
        %1119 = vmatprep.mubr.bf16.mxu0 0
        %1120 = vmatmul.mubr.bf16.gmra.mrb[0].mxu0 %v1082
        %v1121 = vpop.f32.mrb[0].mxu0
        %v1122 = vadd.f32 %v845, %v1121
        %v1123 = vpop.f32.mrb[0].mxu0
        %v1124 = vpop.f32.mrb[0].mxu0
        %v1125 = vpop.f32.mrb[0].mxu0
        %1126 = vdwg.mxu0
        %v1127 = vsel %vm847, %v1122, -inf
        %1128 = vmax.xlane.f32.xlu0 %v1127
        %v1129 = vpop.xlane.xlu0 %1128
        %v1130 = vsub.f32 %v1122, %v1129
        %v1131 = vmul.f32 %v1130, 1.442695
        %v1132 = vpow.pop %v1131
        %v1133 = vsel %vm847, %v1132, 0.0
        %1134 = vadd.xlane.f32.xlu0 %v1133
        %v1135 = vpop.xlane.xlu0 %1134
        %v1136 = vpack.c.bf16 %v1132, %v1132
        %1137 = vrot.lane.b32.xlu0 %v1020, 112
        %v1138 = vpop.permute.xlu0 %1137
        %v1140 = vsel %vm847, %v1136, 0
        %v1143 = vsel %vm907, %v1138, 0
        %1145 = vmatprep.subr.bf16.mxu0 0
        %1146 = vmatpush1.bf16.msra.mxu0 %v1143
        %1147 = vmatprep.subr.bf16.mxu0 0
        %1148 = vmatpush1.bf16.msra.mxu0 0
        %1149 = vmatprep.subr.bf16.mxu0 0
        %1150 = vmatpush1.bf16.msra.mxu0 0
        %1151 = vmatprep.subr.bf16.mxu0 0
        %1152 = vmatpush1.bf16.msra.mxu0 0
        %1153 = vmatprep.subr.bf16.mxu0 0
        %1154 = vmatpush1.bf16.msra.mxu0 0
        %1155 = vmatprep.subr.bf16.mxu0 0
        %1156 = vmatpush1.bf16.msra.mxu0 0
        %1157 = vmatprep.subr.bf16.mxu0 0
        %1158 = vmatpush1.bf16.msra.mxu0 0
        %1159 = vmatprep.subr.bf16.mxu0 0
        %1160 = vmatpush1.bf16.msra.mxu0 0
        %1161 = vmatprep.subr.bf16.mxu0 0
        %1162 = vmatpush1.bf16.msra.mxu0 0
        %1163 = vmatprep.subr.bf16.mxu0 0
        %1164 = vmatpush1.bf16.msra.mxu0 0
        %1165 = vmatprep.subr.bf16.mxu0 0
        %1166 = vmatpush1.bf16.msra.mxu0 0
        %1167 = vmatprep.subr.bf16.mxu0 0
        %1168 = vmatpush1.bf16.msra.mxu0 0
        %1169 = vmatprep.subr.bf16.mxu0 0
        %1170 = vmatpush1.bf16.msra.mxu0 0
        %1171 = vmatprep.subr.bf16.mxu0 0
        %1172 = vmatpush1.bf16.msra.mxu0 0
        %1173 = vmatprep.subr.bf16.mxu0 0
        %1174 = vmatpush1.bf16.msra.mxu0 0
        %1175 = vmatprep.subr.bf16.mxu0 0
        %1176 = vmatpush1.bf16.msra.mxu0 0
        %1177 = vmatprep.mubr.bf16.mxu0 0
        %1178 = vmatmul.mubr.bf16.gmra.mrb[0].mxu0 %v1140
        %v1179 = vpop.f32.mrb[0].mxu0
        %v1180 = vadd.f32 0.0, %v1179
        %v1181 = vpop.f32.mrb[0].mxu0
        %v1182 = vpop.f32.mrb[0].mxu0
        %v1183 = vpop.f32.mrb[0].mxu0
        %1184 = vdwg.mxu0
        %v1185 = vrcp.pop %v1135
        %v1186 = vmul.f32 %v1180, %v1185
        %1188 = vrot.lane.b32.xlu0 %v1186, 16
        %v1189 = vpop.permute.xlu0 %1188
        %vm1191 = vcmask 195712
        %1192 = vst.msk [vmem:[#allocation4] sm:$0xff] %vm1191, %v1189
        %1193 = vrot.lane.b32.xlu0 %v837, 104
        %v1194 = vpop.permute.xlu0 %1193
        %1195 = vrot.lane.b32.xlu0 %v959, 104
        %v1196 = vpop.permute.xlu0 %1195
        %v1198 = vsel %vm847, %v1194, 0
        %v1201 = vsel %vm847, %v1196, 0
        %1203 = vmatprep.subr.bf16.mxu0 0
        %1204 = vmatpush1.bf16.xpose.msra.mxu0 %v1201
        %1205 = vmatprep.subr.bf16.mxu0 0
        %1206 = vmatpush1.bf16.xpose.msra.mxu0 0
        %1207 = vmatprep.subr.bf16.mxu0 0
        %1208 = vmatpush1.bf16.xpose.msra.mxu0 0
        %1209 = vmatprep.subr.bf16.mxu0 0
        %1210 = vmatpush1.bf16.xpose.msra.mxu0 0
        %1211 = vmatprep.subr.bf16.mxu0 0
        %1212 = vmatpush1.bf16.xpose.msra.mxu0 0
        %1213 = vmatprep.subr.bf16.mxu0 0
        %1214 = vmatpush1.bf16.xpose.msra.mxu0 0
        %1215 = vmatprep.subr.bf16.mxu0 0
        %1216 = vmatpush1.bf16.xpose.msra.mxu0 0
        %1217 = vmatprep.subr.bf16.mxu0 0
        %1218 = vmatpush1.bf16.xpose.msra.mxu0 0
        %1219 = vmatprep.subr.bf16.mxu0 0
        %1220 = vmatpush1.bf16.xpose.msra.mxu0 0
        %1221 = vmatprep.subr.bf16.mxu0 0
        %1222 = vmatpush1.bf16.xpose.msra.mxu0 0
        %1223 = vmatprep.subr.bf16.mxu0 0
        %1224 = vmatpush1.bf16.xpose.msra.mxu0 0
        %1225 = vmatprep.subr.bf16.mxu0 0
        %1226 = vmatpush1.bf16.xpose.msra.mxu0 0
        %1227 = vmatprep.subr.bf16.mxu0 0
        %1228 = vmatpush1.bf16.xpose.msra.mxu0 0
        %1229 = vmatprep.subr.bf16.mxu0 0
        %1230 = vmatpush1.bf16.xpose.msra.mxu0 0
        %1231 = vmatprep.subr.bf16.mxu0 0
        %1232 = vmatpush1.bf16.xpose.msra.mxu0 0
        %1233 = vmatprep.subr.bf16.mxu0 0
        %1234 = vmatpush1.bf16.xpose.msra.mxu0 0
        %1235 = vmatprep.mubr.bf16.mxu0 0
        %1236 = vmatmul.mubr.bf16.gmra.mrb[0].mxu0 %v1198
        %v1237 = vpop.f32.mrb[0].mxu0
        %v1238 = vadd.f32 %v845, %v1237
        %v1239 = vpop.f32.mrb[0].mxu0
        %v1240 = vpop.f32.mrb[0].mxu0
        %v1241 = vpop.f32.mrb[0].mxu0
        %1242 = vdwg.mxu0
        %v1243 = vsel %vm847, %v1238, -inf
        %1244 = vmax.xlane.f32.xlu0 %v1243
        %v1245 = vpop.xlane.xlu0 %1244
        %v1246 = vsub.f32 %v1238, %v1245
        %v1247 = vmul.f32 %v1246, 1.442695
        %v1248 = vpow.pop %v1247
        %v1249 = vsel %vm847, %v1248, 0.0
        %1250 = vadd.xlane.f32.xlu0 %v1249
        %v1251 = vpop.xlane.xlu0 %1250
        %v1252 = vpack.c.bf16 %v1248, %v1248
        %1253 = vrot.lane.b32.xlu0 %v1020, 104
        %v1254 = vpop.permute.xlu0 %1253
        %v1256 = vsel %vm847, %v1252, 0
        %v1259 = vsel %vm907, %v1254, 0
        %1261 = vmatprep.subr.bf16.mxu0 0
        %1262 = vmatpush1.bf16.msra.mxu0 %v1259
        %1263 = vmatprep.subr.bf16.mxu0 0
        %1264 = vmatpush1.bf16.msra.mxu0 0
        %1265 = vmatprep.subr.bf16.mxu0 0
        %1266 = vmatpush1.bf16.msra.mxu0 0
        %1267 = vmatprep.subr.bf16.mxu0 0
        %1268 = vmatpush1.bf16.msra.mxu0 0
        %1269 = vmatprep.subr.bf16.mxu0 0
        %1270 = vmatpush1.bf16.msra.mxu0 0
        %1271 = vmatprep.subr.bf16.mxu0 0
        %1272 = vmatpush1.bf16.msra.mxu0 0
        %1273 = vmatprep.subr.bf16.mxu0 0
        %1274 = vmatpush1.bf16.msra.mxu0 0
        %1275 = vmatprep.subr.bf16.mxu0 0
        %1276 = vmatpush1.bf16.msra.mxu0 0
        %1277 = vmatprep.subr.bf16.mxu0 0
        %1278 = vmatpush1.bf16.msra.mxu0 0
        %1279 = vmatprep.subr.bf16.mxu0 0
        %1280 = vmatpush1.bf16.msra.mxu0 0
        %1281 = vmatprep.subr.bf16.mxu0 0
        %1282 = vmatpush1.bf16.msra.mxu0 0
        %1283 = vmatprep.subr.bf16.mxu0 0
        %1284 = vmatpush1.bf16.msra.mxu0 0
        %1285 = vmatprep.subr.bf16.mxu0 0
        %1286 = vmatpush1.bf16.msra.mxu0 0
        %1287 = vmatprep.subr.bf16.mxu0 0
        %1288 = vmatpush1.bf16.msra.mxu0 0
        %1289 = vmatprep.subr.bf16.mxu0 0
        %1290 = vmatpush1.bf16.msra.mxu0 0
        %1291 = vmatprep.subr.bf16.mxu0 0
        %1292 = vmatpush1.bf16.msra.mxu0 0
        %1293 = vmatprep.mubr.bf16.mxu0 0
        %1294 = vmatmul.mubr.bf16.gmra.mrb[0].mxu0 %v1256
        %v1295 = vpop.f32.mrb[0].mxu0
        %v1296 = vadd.f32 0.0, %v1295
        %v1297 = vpop.f32.mrb[0].mxu0
        %v1298 = vpop.f32.mrb[0].mxu0
        %v1299 = vpop.f32.mrb[0].mxu0
        %1300 = vdwg.mxu0
        %v1301 = vrcp.pop %v1251
        %v1302 = vmul.f32 %v1296, %v1301
        %1304 = vrot.lane.b32.xlu0 %v1302, 24
        %v1305 = vpop.permute.xlu0 %1304
        %vm1307 = vcmask 261312
        %1308 = vst.msk [vmem:[#allocation4] sm:$0xff] %vm1307, %v1305
        %v1309 = vld [vmem:[#allocation4] sm:$0xff]
        %v1310 = vpack.c.bf16 %v1309, %v1309
        %v1311 = vld [vmem:[#allocation11] sm:$0xf]
        %v1312 = vld [vmem:[#allocation11 + $0x4] sm:$0xf]
        %v1313 = vld [vmem:[#allocation11 + $0x8] sm:$0xf]
        %v1314 = vld [vmem:[#allocation11 + $0xc] sm:$0xf]
        %v1315 = vld [vmem:[#allocation13] sm:$0x1]
        %v1317 = vlaneseq
        %v1318 = vshrl.u32 %v1317, 7
        %v1319 = vsub.s32 0, %v1318
        %v1320 = vrot.slane %v1315, %v1319
        %v1326 = vunpack.c.l.b16 %v1311
        %v1327 = vunpack.c.l.b16 %v1312
        %v1328 = vunpack.c.l.b16 %v1313
        %v1329 = vunpack.c.l.b16 %v1314
        %v1330 = vpack.c.b16 %v1327, %v1326
        %v1331 = vpack.c.b16 %v1329, %v1328
        %v1335 = vsel %vm793, %v1310, 0
        %1337 = vmatprep.subr.bf16.mxu0 0
        %1338 = vmatpush1.bf16.msra.mxu0 %v1330
        %1339 = vmatprep.subr.bf16.mxu0 0
        %1340 = vmatpush1.bf16.msra.mxu0 %v1331
        %1341 = vmatprep.subr.bf16.mxu0 0
        %1342 = vmatpush1.bf16.msra.mxu0 0
        %1343 = vmatprep.subr.bf16.mxu0 0
        %1344 = vmatpush1.bf16.msra.mxu0 0
        %1345 = vmatprep.subr.bf16.mxu0 0
        %1346 = vmatpush1.bf16.msra.mxu0 0
        %1347 = vmatprep.subr.bf16.mxu0 0
        %1348 = vmatpush1.bf16.msra.mxu0 0
        %1349 = vmatprep.subr.bf16.mxu0 0
        %1350 = vmatpush1.bf16.msra.mxu0 0
        %1351 = vmatprep.subr.bf16.mxu0 0
        %1352 = vmatpush1.bf16.msra.mxu0 0
        %1353 = vmatprep.subr.bf16.mxu0 0
        %1354 = vmatpush1.bf16.msra.mxu0 0
        %1355 = vmatprep.subr.bf16.mxu0 0
        %1356 = vmatpush1.bf16.msra.mxu0 0
        %1357 = vmatprep.subr.bf16.mxu0 0
        %1358 = vmatpush1.bf16.msra.mxu0 0
        %1359 = vmatprep.subr.bf16.mxu0 0
        %1360 = vmatpush1.bf16.msra.mxu0 0
        %1361 = vmatprep.subr.bf16.mxu0 0
        %1362 = vmatpush1.bf16.msra.mxu0 0
        %1363 = vmatprep.subr.bf16.mxu0 0
        %1364 = vmatpush1.bf16.msra.mxu0 0
        %1365 = vmatprep.subr.bf16.mxu0 0
        %1366 = vmatpush1.bf16.msra.mxu0 0
        %1367 = vmatprep.subr.bf16.mxu0 0
        %1368 = vmatpush1.bf16.msra.mxu0 0
        %1369 = vmatprep.mubr.bf16.mxu0 0
        %1370 = vmatmul.mubr.bf16.gmra.mrb[0].mxu0 %v1335
        %v1371 = vpop.f32.mrb[0].mxu0
        %v1372 = vadd.f32 %v1320, %v1371
        %v1373 = vpop.f32.mrb[0].mxu0
        %v1374 = vpop.f32.mrb[0].mxu0
        %v1375 = vpop.f32.mrb[0].mxu0
        %1376 = vdwg.mxu0
        %v1377 = vadd.f32 %v686, %v1372
        %v1378 = vld [vmem:[#allocation14] sm:$0x1]
        %v1379 = vld [vmem:[%s10] sm:$0x1]
        %v1380 = vsel %vm793, %v1377, 0.0
        %1381 = vadd.xlane.f32.xlu0 %v1380
        %v1382 = vpop.xlane.xlu0 %1381
        %v1383 = vrcp.pop 32.0
        %v1384 = vmul.f32 %v1382, %v1383
        %v1385 = vsub.f32 %v1377, %v1384
        %v1386 = vmul.f32 %v1385, %v1385
        %v1387 = vsel %vm793, %v1386, 0.0
        %1388 = vadd.xlane.f32.xlu0 %v1387
        %v1389 = vpop.xlane.xlu0 %1388
        %v1390 = vmul.f32 %v1389, %v1383
        %v1391 = vadd.f32 %v1390, 1e-05
        %v1392 = vrsqrt.pop %v1391
        %v1393 = vmul.f32 %v1385, %v1392
        %v1395 = vlaneseq
        %v1396 = vshrl.u32 %v1395, 7
        %v1397 = vsub.s32 0, %v1396
        %v1398 = vrot.slane %v1378, %v1397
        %v1400 = vmul.f32 %v1393, %v1398
        %v1402 = vlaneseq
        %v1403 = vshrl.u32 %v1402, 7
        %v1404 = vsub.s32 0, %v1403
        %v1405 = vrot.slane %v1379, %v1404
        %v1407 = vadd.f32 %v1400, %v1405
        %v1408 = vpack.c.bf16 %v1407, %v1407
        %v1409 = vld [vmem:[%s11] sm:$0xf]
        %v1410 = vld [vmem:[%s11 + $0x4] sm:$0xf]
        %v1411 = vld [vmem:[%s11 + $0x8] sm:$0xf]
        %v1412 = vld [vmem:[%s11 + $0xc] sm:$0xf]
        %v1413 = vld [vmem:[%s12] sm:$0x1]
        %v1415 = vlaneseq
        %v1416 = vshrl.u32 %v1415, 7
        %v1417 = vsub.s32 0, %v1416
        %v1418 = vrot.slane %v1413, %v1417
        %v1424 = vunpack.c.l.b16 %v1409
        %v1425 = vunpack.c.l.b16 %v1410
        %v1426 = vunpack.c.l.b16 %v1411
        %v1427 = vunpack.c.l.b16 %v1412
        %v1428 = vpack.c.b16 %v1425, %v1424
        %v1429 = vpack.c.b16 %v1427, %v1426
        %v1433 = vsel %vm793, %v1408, 0
        %1435 = vmatprep.subr.bf16.mxu0 0
        %1436 = vmatpush1.bf16.msra.mxu0 %v1428
        %1437 = vmatprep.subr.bf16.mxu0 0
        %1438 = vmatpush1.bf16.msra.mxu0 %v1429
        %1439 = vmatprep.subr.bf16.mxu0 0
        %1440 = vmatpush1.bf16.msra.mxu0 0
        %1441 = vmatprep.subr.bf16.mxu0 0
        %1442 = vmatpush1.bf16.msra.mxu0 0
        %1443 = vmatprep.subr.bf16.mxu0 0
        %1444 = vmatpush1.bf16.msra.mxu0 0
        %1445 = vmatprep.subr.bf16.mxu0 0
        %1446 = vmatpush1.bf16.msra.mxu0 0
        %1447 = vmatprep.subr.bf16.mxu0 0
        %1448 = vmatpush1.bf16.msra.mxu0 0
        %1449 = vmatprep.subr.bf16.mxu0 0
        %1450 = vmatpush1.bf16.msra.mxu0 0
        %1451 = vmatprep.subr.bf16.mxu0 0
        %1452 = vmatpush1.bf16.msra.mxu0 0
        %1453 = vmatprep.subr.bf16.mxu0 0
        %1454 = vmatpush1.bf16.msra.mxu0 0
        %1455 = vmatprep.subr.bf16.mxu0 0
        %1456 = vmatpush1.bf16.msra.mxu0 0
        %1457 = vmatprep.subr.bf16.mxu0 0
        %1458 = vmatpush1.bf16.msra.mxu0 0
        %1459 = vmatprep.subr.bf16.mxu0 0
        %1460 = vmatpush1.bf16.msra.mxu0 0
        %1461 = vmatprep.subr.bf16.mxu0 0
        %1462 = vmatpush1.bf16.msra.mxu0 0
        %1463 = vmatprep.subr.bf16.mxu0 0
        %1464 = vmatpush1.bf16.msra.mxu0 0
        %1465 = vmatprep.subr.bf16.mxu0 0
        %1466 = vmatpush1.bf16.msra.mxu0 0
        %1467 = vmatprep.mubr.bf16.mxu0 0
        %1468 = vmatmul.mubr.bf16.gmra.mrb[0].mxu0 %v1433
        %v1469 = vpop.f32.mrb[0].mxu0
        %v1470 = vadd.f32 %v1418, %v1469
        %v1471 = vpop.f32.mrb[0].mxu0
        %v1472 = vpop.f32.mrb[0].mxu0
        %v1473 = vpop.f32.mrb[0].mxu0
        %1474 = vdwg.mxu0
        %v1475 = vmax.f32 %v1470, 0.0
        %v1476 = vpack.c.bf16 %v1475, %v1475
        %v1477 = vld [vmem:[%s13] sm:$0xf]
        %v1478 = vld [vmem:[%s13 + $0x4] sm:$0xf]
        %v1479 = vld [vmem:[%s13 + $0x8] sm:$0xf]
        %v1480 = vld [vmem:[%s13 + $0xc] sm:$0xf]
        %v1481 = vld [vmem:[%s13 + $0x10] sm:$0xf]
        %v1482 = vld [vmem:[%s13 + $0x14] sm:$0xf]
        %v1483 = vld [vmem:[%s13 + $0x18] sm:$0xf]
        %v1484 = vld [vmem:[%s13 + $0x1c] sm:$0xf]
        %v1485 = vld [vmem:[%s14] sm:$0x1]
        %v1487 = vlaneseq
        %v1488 = vshrl.u32 %v1487, 7
        %v1489 = vsub.s32 0, %v1488
        %v1490 = vrot.slane %v1485, %v1489
        %v1500 = vunpack.c.l.b16 %v1477
        %v1501 = vunpack.c.l.b16 %v1478
        %v1502 = vunpack.c.l.b16 %v1479
        %v1503 = vunpack.c.l.b16 %v1480
        %v1504 = vunpack.c.l.b16 %v1481
        %v1505 = vunpack.c.l.b16 %v1482
        %v1506 = vunpack.c.l.b16 %v1483
        %v1507 = vunpack.c.l.b16 %v1484
        %v1508 = vpack.c.b16 %v1501, %v1500
        %v1509 = vpack.c.b16 %v1503, %v1502
        %v1510 = vpack.c.b16 %v1505, %v1504
        %v1511 = vpack.c.b16 %v1507, %v1506
        %vm1516 = vcmask 523264
        %v1518 = vsel %vm1516, %v1476, 0
        %1520 = vmatprep.subr.bf16.mxu0 0
        %1521 = vmatpush1.bf16.msra.mxu0 %v1508
        %1522 = vmatprep.subr.bf16.mxu0 0
        %1523 = vmatpush1.bf16.msra.mxu0 %v1509
        %1524 = vmatprep.subr.bf16.mxu0 0
        %1525 = vmatpush1.bf16.msra.mxu0 %v1510
        %1526 = vmatprep.subr.bf16.mxu0 0
        %1527 = vmatpush1.bf16.msra.mxu0 %v1511
        %1528 = vmatprep.subr.bf16.mxu0 0
        %1529 = vmatpush1.bf16.msra.mxu0 0
        %1530 = vmatprep.subr.bf16.mxu0 0
        %1531 = vmatpush1.bf16.msra.mxu0 0
        %1532 = vmatprep.subr.bf16.mxu0 0
        %1533 = vmatpush1.bf16.msra.mxu0 0
        %1534 = vmatprep.subr.bf16.mxu0 0
        %1535 = vmatpush1.bf16.msra.mxu0 0
        %1536 = vmatprep.subr.bf16.mxu0 0
        %1537 = vmatpush1.bf16.msra.mxu0 0
        %1538 = vmatprep.subr.bf16.mxu0 0
        %1539 = vmatpush1.bf16.msra.mxu0 0
        %1540 = vmatprep.subr.bf16.mxu0 0
        %1541 = vmatpush1.bf16.msra.mxu0 0
        %1542 = vmatprep.subr.bf16.mxu0 0
        %1543 = vmatpush1.bf16.msra.mxu0 0
        %1544 = vmatprep.subr.bf16.mxu0 0
        %1545 = vmatpush1.bf16.msra.mxu0 0
        %1546 = vmatprep.subr.bf16.mxu0 0
        %1547 = vmatpush1.bf16.msra.mxu0 0
        %1548 = vmatprep.subr.bf16.mxu0 0
        %1549 = vmatpush1.bf16.msra.mxu0 0
        %1550 = vmatprep.subr.bf16.mxu0 0
        %1551 = vmatpush1.bf16.msra.mxu0 0
        %1552 = vmatprep.mubr.bf16.mxu0 0
        %1553 = vmatmul.mubr.bf16.gmra.mrb[0].mxu0 %v1518
        %v1554 = vpop.f32.mrb[0].mxu0
        %v1555 = vadd.f32 %v1490, %v1554
        %v1556 = vpop.f32.mrb[0].mxu0
        %v1557 = vpop.f32.mrb[0].mxu0
        %v1558 = vpop.f32.mrb[0].mxu0
        %1559 = vdwg.mxu0
        %v1560 = vadd.f32 %v1407, %v1555
        %v1561 = vld [vmem:[%s15] sm:$0x1]
        %v1562 = vld [vmem:[%s16] sm:$0x1]
        %v1563 = vsel %vm793, %v1560, 0.0
        %1564 = vadd.xlane.f32.xlu0 %v1563
        %v1565 = vpop.xlane.xlu0 %1564
        %v1566 = vmul.f32 %v1565, %v1383
        %v1567 = vsub.f32 %v1560, %v1566
        %v1568 = vmul.f32 %v1567, %v1567
        %v1569 = vsel %vm793, %v1568, 0.0
        %1570 = vadd.xlane.f32.xlu0 %v1569
        %v1571 = vpop.xlane.xlu0 %1570
        %v1572 = vmul.f32 %v1571, %v1383
        %v1573 = vadd.f32 %v1572, 1e-05
        %v1574 = vrsqrt.pop %v1573
        %v1575 = vmul.f32 %v1567, %v1574
        %v1577 = vlaneseq
        %v1578 = vshrl.u32 %v1577, 7
        %v1579 = vsub.s32 0, %v1578
        %v1580 = vrot.slane %v1561, %v1579
        %v1582 = vmul.f32 %v1575, %v1580
        %v1584 = vlaneseq
        %v1585 = vshrl.u32 %v1584, 7
        %v1586 = vsub.s32 0, %v1585
        %v1587 = vrot.slane %v1562, %v1586
        %v1589 = vadd.f32 %v1582, %v1587
        %1590 = vst.msk [vmem:[%s674] sm:$0xff] %vm793, %v1589
        %s1591 = sand.u32 %s433, 1
        %s1592 = scalar_lea.sflag [#allocation7], %s1591
        %s1593 = sand.u32 %s433, 1
        %s1594 = smul.addr %s1593, 8
        %s1595 = scalar_lea.vmem [#allocation16], %s1594
        // Predicated region
        $region117: #{tpu_custom_call.1} parent=87 // pred_check
          %p1596 = pneg %p443
        $region118: #{tpu_custom_call.1} parent=87 // pred_check_branch
          %1598 = sbr.rel (%p1596) target = $region120
        $region119: #{tpu_custom_call.1} parent=87 // pred_region
          %s1600 = ssub.s32 128, 128
          %1601 = vsyncadd %s1592, %s1600
          %s1602 = sadd.s32 %s42, %s41
          %s1603 = smul.addr %s1602, 128
          %s1604 = scalar_lea.hbm %s17, %s1603
          %s1606 = sshll.u32 %s1595, 4
          %s1607 = int_to_ptr.vmem [resolvable:$true] %s1606
          %1609 = dma.vmem_to_hbm [thread:$0]  %s1607, 128, %s1604, %s1592
        $region120: #{tpu_custom_call.1} parent=87 // pred_fallthru
          _
      $region88: #{tpu_custom_call.1} parent=5 // pred_fallthru
        _
      %p1610 = scmp.le.s32.totalorder 2, %s32
      // Predicated region
      $region121: #{tpu_custom_call.1} parent=5 // pred_check
        %p1611 = pneg %p1610
      $region122: #{tpu_custom_call.1} parent=5 // pred_check_branch
        %1613 = sbr.rel (%p1611) target = $region124
      $region123: #{tpu_custom_call.1} parent=5 // pred_region
        %s1614 = ssub.s32 %s32, 2
        // Predicated region
        $region125: #{tpu_custom_call.1} parent=123 // pred_check
          %p1615 = pneg %p449
        $region126: #{tpu_custom_call.1} parent=123 // pred_check_branch
          %1617 = sbr.rel (%p1615) target = $region128
        $region127: #{tpu_custom_call.1} parent=123 // pred_region
          %s1618 = sand.u32 %s434, 1
          %s1619 = scalar_lea.sflag [#allocation7], %s1618
          %s1620 = sand.u32 %s434, 1
          %s1621 = smul.addr %s1620, 8
          %s1622 = scalar_lea.vmem [#allocation16], %s1621
          %1623 = dma.done %s1619, 128
        $region128: #{tpu_custom_call.1} parent=123 // pred_fallthru
          _
      $region124: #{tpu_custom_call.1} parent=5 // pred_fallthru
        _
    $region6: #{tpu_custom_call.1} parent=1 // loop_footer
      %s36 = sadd.s32 1, %s32
    $region7: #{tpu_custom_call.1} parent=1 // loop_footer_branch
      %31 = sbr.rel target = $region3
    $region8: #{tpu_custom_call.1} parent=1 // loop_exit
      _
    %1624 = vsyncpa [#allocation6], 1
    %s1625 = scalar_lea.sflag [#allocation6], 1
    %1626 = vsyncpa %s1625, 1
    %1627 = vsyncpa [#allocation9], 1
    %1628 = vsyncpa [#allocation12], 1
    %1629 = vsyncpa [#allocation15], 1
    %1630 = vsyncpa [#allocation7], 1
    %s1631 = scalar_lea.sflag [#allocation7], 1
    %1632 = vsyncpa %s1631, 1

</llo_original>
